<compile_context>
chip_gen: v5e
topology: v5e:2x2
jax: 0.10.0
libtpu: 0.0.40
codegen_flags: <defaults>
</compile_context>

<pallas_src>
import jax
import jax.numpy as jnp
from jax import lax
from jax.experimental import pallas as pl
from jax.experimental.pallas import tpu as pltpu


def _round_up(x, m):
    return (x + m - 1) // m * m


def conv3x3_pallas(img, seg, w, b, *, batch_block=1):
    """Fused cat([img, seg], dim=1) + 3x3 conv (stride 1, SAME) + bias, NCHW.

    img: (N, Cimg, H, W) f32;  seg: (N, Cseg, H, W) f32
    w:   (3, 3, Cin, Cout) f32 with Cin = Cimg + Cseg;  b: (Cout,) f32
    Returns (N, Cout, H, W) f32.
    """
    N, Cimg, H, W = img.shape
    Cseg = seg.shape[1]
    Cin = Cimg + Cseg
    Cout = w.shape[-1]
    assert w.shape == (3, 3, Cin, Cout)

    Hp, Wp = H + 2, W + 2
    # Outputs are computed on the flat *padded* spatial domain: the valid SAME-conv
    # output for pixel (h, w) lives at flat index h*Wp + w.  P covers all valid
    # indices and is a multiple of 128 -> lane-dense, unmasked stores.
    P = _round_up(H * Wp, 128)
    max_off = 2 * Wp + 2                       # largest tap offset (ky=kx=2)
    L = _round_up(max(Hp * Wp, max_off + P), 128)   # padded flat input extent
    Cout_pad = _round_up(Cout, 8)              # aligned sublane stores

    batch_block = min(batch_block, N)
    assert N % batch_block == 0, "batch_block must divide N"

    # ---- wrapper-side layout prep (one cheap pass; no 9x patch blowup) ----------
    def pad_flatten(x):
        xp = jnp.pad(x, ((0, 0), (0, 0), (1, 1), (1, 1)))          # zero SAME pad
        xf = xp.reshape(x.shape[0], x.shape[1], Hp * Wp)
        xf = jnp.pad(xf, ((0, 0), (0, 0), (0, L - Hp * Wp)))       # lane tail pad
        return xf.astype(jnp.bfloat16)

    img_f = pad_flatten(img)                   # (N, Cimg, L) bf16
    seg_f = pad_flatten(seg)                   # (N, Cseg, L) bf16

    # Per-tap weights: (9, Cout_pad, Cin_src), tap order t = ky*3 + kx.
    w_t = jnp.transpose(w.reshape(9, Cin, Cout), (0, 2, 1))        # (9, Cout, Cin)
    w_t = jnp.pad(w_t, ((0, 0), (0, Cout_pad - Cout), (0, 0)))
    w_img = w_t[:, :, :Cimg].astype(jnp.bfloat16)
    w_seg = w_t[:, :, Cimg:].astype(jnp.bfloat16)
    b_pad = jnp.pad(b, (0, Cout_pad - Cout)).reshape(Cout_pad, 1).astype(jnp.float32)

    def kernel(img_ref, seg_ref, wimg_ref, wseg_ref, b_ref, o_ref):
        wi = wimg_ref[...]                     # (9, Cout_pad, Cimg) bf16
        ws = wseg_ref[...]                     # (9, Cout_pad, Cseg) bf16
        bias = b_ref[...]                      # (Cout_pad, 1) f32
        for bb in range(batch_block):          # static unroll over batch block
            x_i = img_ref[bb]                  # (Cimg, L) bf16
            x_s = seg_ref[bb]                  # (Cseg, L) bf16
            acc = jnp.zeros((Cout_pad, P), jnp.float32)
            for t in range(9):                 # in-kernel im2col: shifted views
                off = (t // 3) * Wp + (t % 3)
                acc = acc + jnp.dot(wi[t], x_i[:, off:off + P],
                                    preferred_element_type=jnp.float32)
                acc = acc + jnp.dot(ws[t], x_s[:, off:off + P],
                                    preferred_element_type=jnp.float32)
            o_ref[bb] = acc + bias             # f32 bias add on the VPU

    out = pl.pallas_call(
        kernel,
        out_shape=jax.ShapeDtypeStruct((N, Cout_pad, P), jnp.float32),
        grid=(N // batch_block,),
        in_specs=[
            pl.BlockSpec((batch_block, Cimg, L), lambda g: (g, 0, 0)),
            pl.BlockSpec((batch_block, Cseg, L), lambda g: (g, 0, 0)),
            pl.BlockSpec((9, Cout_pad, Cimg), lambda g: (0, 0, 0)),
            pl.BlockSpec((9, Cout_pad, Cseg), lambda g: (0, 0, 0)),
            pl.BlockSpec((Cout_pad, 1), lambda g: (0, 0)),
        ],
        out_specs=pl.BlockSpec((batch_block, Cout_pad, P), lambda g: (g, 0, 0)),
        compiler_params=pltpu.CompilerParams(
            dimension_semantics=("parallel",)),
    )(img_f, seg_f, w_img, w_seg, b_pad)

    # Flat padded-domain -> NCHW: pure slice/reshape on the tiny f32 output.
    out = out[:, :Cout, :H * Wp].reshape(N, Cout, H, Wp)[:, :, :, :W]
    return out


def internet_forward(inp_nchw, seg_nchw, w, b, n_rgb=3, *, batch_block=1):
    """InterNet.forward: cat([input, seg], dim=1) -> coarse_model -> (rgb, seg).

    The channel concat is fused into the Pallas kernel (no HBM copy of the
    concatenated activation)."""
    out_nchw = conv3x3_pallas(inp_nchw, seg_nchw, w, b, batch_block=batch_block)
    coarse_rgb = out_nchw[:, :n_rgb]
    coarse_seg = out_nchw[:, n_rgb:]
    return coarse_rgb, coarse_seg


if __name__ == "__main__":
    # Small deterministic shapes: batch=2, 4 image ch, 4 seg ch, 16x16 spatial.
    N, C_IMG, C_SEG, H, W = 2, 4, 4, 16, 16
    C_IN = C_IMG + C_SEG
    N_RGB = 3
    C_OUT = N_RGB + C_SEG

    key = jax.random.PRNGKey(0)
    k_in, k_seg, k_w, k_b = jax.random.split(key, 4)

    inp = jax.random.normal(k_in, (N, C_IMG, H, W), dtype=jnp.float32)
    seg = jax.random.normal(k_seg, (N, C_SEG, H, W), dtype=jnp.float32)
    w = jax.random.normal(k_w, (3, 3, C_IN, C_OUT), dtype=jnp.float32) * 0.1
    b = jax.random.normal(k_b, (C_OUT,), dtype=jnp.float32) * 0.1

    coarse_rgb, coarse_seg = internet_forward(
        inp, seg, w, b, n_rgb=N_RGB, batch_block=2)
    jax.block_until_ready((coarse_rgb, coarse_seg))

    # Reference check against XLA's f32 conv (NCHW, HWIO).  Tolerance accounts for
    # the bf16 MXU inputs (accumulation and bias stay f32).
    low = jnp.concatenate([inp, seg], axis=1)
    ref = lax.conv_general_dilated(
        low, w, window_strides=(1, 1), padding="SAME",
        dimension_numbers=("NCHW", "HWIO", "NCHW"),
    ) + b.reshape(1, C_OUT, 1, 1)
    assert jnp.allclose(coarse_rgb, ref[:, :N_RGB], atol=2e-2, rtol=2e-2)
    assert jnp.allclose(coarse_seg, ref[:, N_RGB:], atol=2e-2, rtol=2e-2)
    assert coarse_rgb.shape == (N, N_RGB, H, W)
    assert coarse_seg.shape == (N, C_SEG, H, W)

    print("KERNEL_OK")
</pallas_src>

<mosaic_0001>
module attributes {stable_mosaic.version = 11 : i64} {
  func.func @kernel(%arg0: i32, %arg1: memref<2x4x512xbf16, #tpu.memory_space<vmem>>, %arg2: memref<2x4x512xbf16, #tpu.memory_space<vmem>>, %arg3: memref<9x8x4xbf16, #tpu.memory_space<vmem>>, %arg4: memref<9x8x4xbf16, #tpu.memory_space<vmem>>, %arg5: memref<8x1xf32, #tpu.memory_space<vmem>>, %arg6: memref<2x8x384xf32, #tpu.memory_space<vmem>>) attributes {dimension_semantics = [#tpu.dimension_semantics<parallel>], iteration_bounds = array<i64: 1>, scalar_prefetch = 0 : i64, scratch_operands = 0 : i64, tpu.core_type = #tpu.core_type<tc>, window_params = [{transform_indices = @transform_0, window_bounds = array<i64: 2, 4, 512>}, {transform_indices = @transform_1, window_bounds = array<i64: 2, 4, 512>}, {pipeline_mode = #tpu.pipeline_mode<synchronous>, transform_indices = @transform_2, window_bounds = array<i64: 9, 8, 4>}, {pipeline_mode = #tpu.pipeline_mode<synchronous>, transform_indices = @transform_3, window_bounds = array<i64: 9, 8, 4>}, {pipeline_mode = #tpu.pipeline_mode<synchronous>, transform_indices = @transform_4, window_bounds = array<i64: 8, 1>}, {transform_indices = @transform_5, window_bounds = array<i64: 2, 8, 384>}]} {
    %c0 = arith.constant 0 : index
    %c0_0 = arith.constant 0 : index
    %c0_1 = arith.constant 0 : index
    %0 = vector.load %arg3[%c0, %c0_0, %c0_1] : memref<9x8x4xbf16, #tpu.memory_space<vmem>>, vector<9x8x4xbf16>
    %c0_2 = arith.constant 0 : index
    %c0_3 = arith.constant 0 : index
    %c0_4 = arith.constant 0 : index
    %1 = vector.load %arg4[%c0_2, %c0_3, %c0_4] : memref<9x8x4xbf16, #tpu.memory_space<vmem>>, vector<9x8x4xbf16>
    %c0_5 = arith.constant 0 : index
    %c0_6 = arith.constant 0 : index
    %2 = vector.load %arg5[%c0_5, %c0_6] : memref<8x1xf32, #tpu.memory_space<vmem>>, vector<8x1xf32>
    %c0_7 = arith.constant 0 : index
    %c0_8 = arith.constant 0 : index
    %c0_9 = arith.constant 0 : index
    %3 = vector.load %arg1[%c0_7, %c0_8, %c0_9] : memref<2x4x512xbf16, #tpu.memory_space<vmem>>, vector<1x4x512xbf16>
    %4 = vector.shape_cast %3 : vector<1x4x512xbf16> to vector<4x512xbf16>
    %c0_10 = arith.constant 0 : index
    %c0_11 = arith.constant 0 : index
    %c0_12 = arith.constant 0 : index
    %5 = vector.load %arg2[%c0_10, %c0_11, %c0_12] : memref<2x4x512xbf16, #tpu.memory_space<vmem>>, vector<1x4x512xbf16>
    %6 = vector.shape_cast %5 : vector<1x4x512xbf16> to vector<4x512xbf16>
    %cst = arith.constant 0.000000e+00 : f32
    %7 = vector.broadcast %cst : f32 to vector<8x384xf32>
    %8 = vector.extract_strided_slice %0 {offsets = [0, 0, 0], sizes = [1, 8, 4], strides = [1, 1, 1]} : vector<9x8x4xbf16> to vector<1x8x4xbf16>
    %9 = vector.shape_cast %8 : vector<1x8x4xbf16> to vector<8x4xbf16>
    %10 = vector.extract_strided_slice %4 {offsets = [0, 0], sizes = [4, 384], strides = [1, 1]} : vector<4x512xbf16> to vector<4x384xbf16>
    %cst_13 = arith.constant dense<0.000000e+00> : vector<8x384xf32>
    %11 = tpu.matmul %9, %10, %cst_13 {dimension_numbers = #tpu.dot_dimension_numbers<[1], [0], [0], [1], [0, 0, 1, 1], [], []>} : vector<8x4xbf16>, vector<4x384xbf16>, vector<8x384xf32> -> vector<8x384xf32>
    %12 = arith.addf %7, %11 : vector<8x384xf32>
    %13 = vector.extract_strided_slice %1 {offsets = [0, 0, 0], sizes = [1, 8, 4], strides = [1, 1, 1]} : vector<9x8x4xbf16> to vector<1x8x4xbf16>
    %14 = vector.shape_cast %13 : vector<1x8x4xbf16> to vector<8x4xbf16>
    %15 = vector.extract_strided_slice %6 {offsets = [0, 0], sizes = [4, 384], strides = [1, 1]} : vector<4x512xbf16> to vector<4x384xbf16>
    %cst_14 = arith.constant dense<0.000000e+00> : vector<8x384xf32>
    %16 = tpu.matmul %14, %15, %cst_14 {dimension_numbers = #tpu.dot_dimension_numbers<[1], [0], [0], [1], [0, 0, 1, 1], [], []>} : vector<8x4xbf16>, vector<4x384xbf16>, vector<8x384xf32> -> vector<8x384xf32>
    %17 = arith.addf %12, %16 : vector<8x384xf32>
    %18 = vector.extract_strided_slice %0 {offsets = [1, 0, 0], sizes = [1, 8, 4], strides = [1, 1, 1]} : vector<9x8x4xbf16> to vector<1x8x4xbf16>
    %19 = vector.shape_cast %18 : vector<1x8x4xbf16> to vector<8x4xbf16>
    %20 = vector.extract_strided_slice %4 {offsets = [0, 1], sizes = [4, 384], strides = [1, 1]} : vector<4x512xbf16> to vector<4x384xbf16>
    %cst_15 = arith.constant dense<0.000000e+00> : vector<8x384xf32>
    %21 = tpu.matmul %19, %20, %cst_15 {dimension_numbers = #tpu.dot_dimension_numbers<[1], [0], [0], [1], [0, 0, 1, 1], [], []>} : vector<8x4xbf16>, vector<4x384xbf16>, vector<8x384xf32> -> vector<8x384xf32>
    %22 = arith.addf %17, %21 : vector<8x384xf32>
    %23 = vector.extract_strided_slice %1 {offsets = [1, 0, 0], sizes = [1, 8, 4], strides = [1, 1, 1]} : vector<9x8x4xbf16> to vector<1x8x4xbf16>
    %24 = vector.shape_cast %23 : vector<1x8x4xbf16> to vector<8x4xbf16>
    %25 = vector.extract_strided_slice %6 {offsets = [0, 1], sizes = [4, 384], strides = [1, 1]} : vector<4x512xbf16> to vector<4x384xbf16>
    %cst_16 = arith.constant dense<0.000000e+00> : vector<8x384xf32>
    %26 = tpu.matmul %24, %25, %cst_16 {dimension_numbers = #tpu.dot_dimension_numbers<[1], [0], [0], [1], [0, 0, 1, 1], [], []>} : vector<8x4xbf16>, vector<4x384xbf16>, vector<8x384xf32> -> vector<8x384xf32>
    %27 = arith.addf %22, %26 : vector<8x384xf32>
    %28 = vector.extract_strided_slice %0 {offsets = [2, 0, 0], sizes = [1, 8, 4], strides = [1, 1, 1]} : vector<9x8x4xbf16> to vector<1x8x4xbf16>
    %29 = vector.shape_cast %28 : vector<1x8x4xbf16> to vector<8x4xbf16>
    %30 = vector.extract_strided_slice %4 {offsets = [0, 2], sizes = [4, 384], strides = [1, 1]} : vector<4x512xbf16> to vector<4x384xbf16>
    %cst_17 = arith.constant dense<0.000000e+00> : vector<8x384xf32>
    %31 = tpu.matmul %29, %30, %cst_17 {dimension_numbers = #tpu.dot_dimension_numbers<[1], [0], [0], [1], [0, 0, 1, 1], [], []>} : vector<8x4xbf16>, vector<4x384xbf16>, vector<8x384xf32> -> vector<8x384xf32>
    %32 = arith.addf %27, %31 : vector<8x384xf32>
    %33 = vector.extract_strided_slice %1 {offsets = [2, 0, 0], sizes = [1, 8, 4], strides = [1, 1, 1]} : vector<9x8x4xbf16> to vector<1x8x4xbf16>
    %34 = vector.shape_cast %33 : vector<1x8x4xbf16> to vector<8x4xbf16>
    %35 = vector.extract_strided_slice %6 {offsets = [0, 2], sizes = [4, 384], strides = [1, 1]} : vector<4x512xbf16> to vector<4x384xbf16>
    %cst_18 = arith.constant dense<0.000000e+00> : vector<8x384xf32>
    %36 = tpu.matmul %34, %35, %cst_18 {dimension_numbers = #tpu.dot_dimension_numbers<[1], [0], [0], [1], [0, 0, 1, 1], [], []>} : vector<8x4xbf16>, vector<4x384xbf16>, vector<8x384xf32> -> vector<8x384xf32>
    %37 = arith.addf %32, %36 : vector<8x384xf32>
    %38 = vector.extract_strided_slice %0 {offsets = [3, 0, 0], sizes = [1, 8, 4], strides = [1, 1, 1]} : vector<9x8x4xbf16> to vector<1x8x4xbf16>
    %39 = vector.shape_cast %38 : vector<1x8x4xbf16> to vector<8x4xbf16>
    %40 = vector.extract_strided_slice %4 {offsets = [0, 18], sizes = [4, 384], strides = [1, 1]} : vector<4x512xbf16> to vector<4x384xbf16>
    %cst_19 = arith.constant dense<0.000000e+00> : vector<8x384xf32>
    %41 = tpu.matmul %39, %40, %cst_19 {dimension_numbers = #tpu.dot_dimension_numbers<[1], [0], [0], [1], [0, 0, 1, 1], [], []>} : vector<8x4xbf16>, vector<4x384xbf16>, vector<8x384xf32> -> vector<8x384xf32>
    %42 = arith.addf %37, %41 : vector<8x384xf32>
    %43 = vector.extract_strided_slice %1 {offsets = [3, 0, 0], sizes = [1, 8, 4], strides = [1, 1, 1]} : vector<9x8x4xbf16> to vector<1x8x4xbf16>
    %44 = vector.shape_cast %43 : vector<1x8x4xbf16> to vector<8x4xbf16>
    %45 = vector.extract_strided_slice %6 {offsets = [0, 18], sizes = [4, 384], strides = [1, 1]} : vector<4x512xbf16> to vector<4x384xbf16>
    %cst_20 = arith.constant dense<0.000000e+00> : vector<8x384xf32>
    %46 = tpu.matmul %44, %45, %cst_20 {dimension_numbers = #tpu.dot_dimension_numbers<[1], [0], [0], [1], [0, 0, 1, 1], [], []>} : vector<8x4xbf16>, vector<4x384xbf16>, vector<8x384xf32> -> vector<8x384xf32>
    %47 = arith.addf %42, %46 : vector<8x384xf32>
    %48 = vector.extract_strided_slice %0 {offsets = [4, 0, 0], sizes = [1, 8, 4], strides = [1, 1, 1]} : vector<9x8x4xbf16> to vector<1x8x4xbf16>
    %49 = vector.shape_cast %48 : vector<1x8x4xbf16> to vector<8x4xbf16>
    %50 = vector.extract_strided_slice %4 {offsets = [0, 19], sizes = [4, 384], strides = [1, 1]} : vector<4x512xbf16> to vector<4x384xbf16>
    %cst_21 = arith.constant dense<0.000000e+00> : vector<8x384xf32>
    %51 = tpu.matmul %49, %50, %cst_21 {dimension_numbers = #tpu.dot_dimension_numbers<[1], [0], [0], [1], [0, 0, 1, 1], [], []>} : vector<8x4xbf16>, vector<4x384xbf16>, vector<8x384xf32> -> vector<8x384xf32>
    %52 = arith.addf %47, %51 : vector<8x384xf32>
    %53 = vector.extract_strided_slice %1 {offsets = [4, 0, 0], sizes = [1, 8, 4], strides = [1, 1, 1]} : vector<9x8x4xbf16> to vector<1x8x4xbf16>
    %54 = vector.shape_cast %53 : vector<1x8x4xbf16> to vector<8x4xbf16>
    %55 = vector.extract_strided_slice %6 {offsets = [0, 19], sizes = [4, 384], strides = [1, 1]} : vector<4x512xbf16> to vector<4x384xbf16>
    %cst_22 = arith.constant dense<0.000000e+00> : vector<8x384xf32>
    %56 = tpu.matmul %54, %55, %cst_22 {dimension_numbers = #tpu.dot_dimension_numbers<[1], [0], [0], [1], [0, 0, 1, 1], [], []>} : vector<8x4xbf16>, vector<4x384xbf16>, vector<8x384xf32> -> vector<8x384xf32>
    %57 = arith.addf %52, %56 : vector<8x384xf32>
    %58 = vector.extract_strided_slice %0 {offsets = [5, 0, 0], sizes = [1, 8, 4], strides = [1, 1, 1]} : vector<9x8x4xbf16> to vector<1x8x4xbf16>
    %59 = vector.shape_cast %58 : vector<1x8x4xbf16> to vector<8x4xbf16>
    %60 = vector.extract_strided_slice %4 {offsets = [0, 20], sizes = [4, 384], strides = [1, 1]} : vector<4x512xbf16> to vector<4x384xbf16>
    %cst_23 = arith.constant dense<0.000000e+00> : vector<8x384xf32>
    %61 = tpu.matmul %59, %60, %cst_23 {dimension_numbers = #tpu.dot_dimension_numbers<[1], [0], [0], [1], [0, 0, 1, 1], [], []>} : vector<8x4xbf16>, vector<4x384xbf16>, vector<8x384xf32> -> vector<8x384xf32>
    %62 = arith.addf %57, %61 : vector<8x384xf32>
    %63 = vector.extract_strided_slice %1 {offsets = [5, 0, 0], sizes = [1, 8, 4], strides = [1, 1, 1]} : vector<9x8x4xbf16> to vector<1x8x4xbf16>
    %64 = vector.shape_cast %63 : vector<1x8x4xbf16> to vector<8x4xbf16>
    %65 = vector.extract_strided_slice %6 {offsets = [0, 20], sizes = [4, 384], strides = [1, 1]} : vector<4x512xbf16> to vector<4x384xbf16>
    %cst_24 = arith.constant dense<0.000000e+00> : vector<8x384xf32>
    %66 = tpu.matmul %64, %65, %cst_24 {dimension_numbers = #tpu.dot_dimension_numbers<[1], [0], [0], [1], [0, 0, 1, 1], [], []>} : vector<8x4xbf16>, vector<4x384xbf16>, vector<8x384xf32> -> vector<8x384xf32>
    %67 = arith.addf %62, %66 : vector<8x384xf32>
    %68 = vector.extract_strided_slice %0 {offsets = [6, 0, 0], sizes = [1, 8, 4], strides = [1, 1, 1]} : vector<9x8x4xbf16> to vector<1x8x4xbf16>
    %69 = vector.shape_cast %68 : vector<1x8x4xbf16> to vector<8x4xbf16>
    %70 = vector.extract_strided_slice %4 {offsets = [0, 36], sizes = [4, 384], strides = [1, 1]} : vector<4x512xbf16> to vector<4x384xbf16>
    %cst_25 = arith.constant dense<0.000000e+00> : vector<8x384xf32>
    %71 = tpu.matmul %69, %70, %cst_25 {dimension_numbers = #tpu.dot_dimension_numbers<[1], [0], [0], [1], [0, 0, 1, 1], [], []>} : vector<8x4xbf16>, vector<4x384xbf16>, vector<8x384xf32> -> vector<8x384xf32>
    %72 = arith.addf %67, %71 : vector<8x384xf32>
    %73 = vector.extract_strided_slice %1 {offsets = [6, 0, 0], sizes = [1, 8, 4], strides = [1, 1, 1]} : vector<9x8x4xbf16> to vector<1x8x4xbf16>
    %74 = vector.shape_cast %73 : vector<1x8x4xbf16> to vector<8x4xbf16>
    %75 = vector.extract_strided_slice %6 {offsets = [0, 36], sizes = [4, 384], strides = [1, 1]} : vector<4x512xbf16> to vector<4x384xbf16>
    %cst_26 = arith.constant dense<0.000000e+00> : vector<8x384xf32>
    %76 = tpu.matmul %74, %75, %cst_26 {dimension_numbers = #tpu.dot_dimension_numbers<[1], [0], [0], [1], [0, 0, 1, 1], [], []>} : vector<8x4xbf16>, vector<4x384xbf16>, vector<8x384xf32> -> vector<8x384xf32>
    %77 = arith.addf %72, %76 : vector<8x384xf32>
    %78 = vector.extract_strided_slice %0 {offsets = [7, 0, 0], sizes = [1, 8, 4], strides = [1, 1, 1]} : vector<9x8x4xbf16> to vector<1x8x4xbf16>
    %79 = vector.shape_cast %78 : vector<1x8x4xbf16> to vector<8x4xbf16>
    %80 = vector.extract_strided_slice %4 {offsets = [0, 37], sizes = [4, 384], strides = [1, 1]} : vector<4x512xbf16> to vector<4x384xbf16>
    %cst_27 = arith.constant dense<0.000000e+00> : vector<8x384xf32>
    %81 = tpu.matmul %79, %80, %cst_27 {dimension_numbers = #tpu.dot_dimension_numbers<[1], [0], [0], [1], [0, 0, 1, 1], [], []>} : vector<8x4xbf16>, vector<4x384xbf16>, vector<8x384xf32> -> vector<8x384xf32>
    %82 = arith.addf %77, %81 : vector<8x384xf32>
    %83 = vector.extract_strided_slice %1 {offsets = [7, 0, 0], sizes = [1, 8, 4], strides = [1, 1, 1]} : vector<9x8x4xbf16> to vector<1x8x4xbf16>
    %84 = vector.shape_cast %83 : vector<1x8x4xbf16> to vector<8x4xbf16>
    %85 = vector.extract_strided_slice %6 {offsets = [0, 37], sizes = [4, 384], strides = [1, 1]} : vector<4x512xbf16> to vector<4x384xbf16>
    %cst_28 = arith.constant dense<0.000000e+00> : vector<8x384xf32>
    %86 = tpu.matmul %84, %85, %cst_28 {dimension_numbers = #tpu.dot_dimension_numbers<[1], [0], [0], [1], [0, 0, 1, 1], [], []>} : vector<8x4xbf16>, vector<4x384xbf16>, vector<8x384xf32> -> vector<8x384xf32>
    %87 = arith.addf %82, %86 : vector<8x384xf32>
    %88 = vector.extract_strided_slice %0 {offsets = [8, 0, 0], sizes = [1, 8, 4], strides = [1, 1, 1]} : vector<9x8x4xbf16> to vector<1x8x4xbf16>
    %89 = vector.shape_cast %88 : vector<1x8x4xbf16> to vector<8x4xbf16>
    %90 = vector.extract_strided_slice %4 {offsets = [0, 38], sizes = [4, 384], strides = [1, 1]} : vector<4x512xbf16> to vector<4x384xbf16>
    %cst_29 = arith.constant dense<0.000000e+00> : vector<8x384xf32>
    %91 = tpu.matmul %89, %90, %cst_29 {dimension_numbers = #tpu.dot_dimension_numbers<[1], [0], [0], [1], [0, 0, 1, 1], [], []>} : vector<8x4xbf16>, vector<4x384xbf16>, vector<8x384xf32> -> vector<8x384xf32>
    %92 = arith.addf %87, %91 : vector<8x384xf32>
    %93 = vector.extract_strided_slice %1 {offsets = [8, 0, 0], sizes = [1, 8, 4], strides = [1, 1, 1]} : vector<9x8x4xbf16> to vector<1x8x4xbf16>
    %94 = vector.shape_cast %93 : vector<1x8x4xbf16> to vector<8x4xbf16>
    %95 = vector.extract_strided_slice %6 {offsets = [0, 38], sizes = [4, 384], strides = [1, 1]} : vector<4x512xbf16> to vector<4x384xbf16>
    %cst_30 = arith.constant dense<0.000000e+00> : vector<8x384xf32>
    %96 = tpu.matmul %94, %95, %cst_30 {dimension_numbers = #tpu.dot_dimension_numbers<[1], [0], [0], [1], [0, 0, 1, 1], [], []>} : vector<8x4xbf16>, vector<4x384xbf16>, vector<8x384xf32> -> vector<8x384xf32>
    %97 = arith.addf %92, %96 : vector<8x384xf32>
    %98 = vector.broadcast %2 : vector<8x1xf32> to vector<8x384xf32>
    %99 = arith.addf %97, %98 : vector<8x384xf32>
    %c0_31 = arith.constant 0 : index
    %c0_32 = arith.constant 0 : index
    %c0_33 = arith.constant 0 : index
    %100 = vector.load %arg6[%c0_31, %c0_32, %c0_33] : memref<2x8x384xf32, #tpu.memory_space<vmem>>, vector<1x8x384xf32>
    %101 = vector.shape_cast %100 : vector<1x8x384xf32> to vector<8x384xf32>
    %102 = vector.shape_cast %99 : vector<8x384xf32> to vector<1x8x384xf32>
    tpu.vector_store %arg6[%c0_31, %c0_32, %c0_33], %102 {strides = array<i32>} : memref<2x8x384xf32, #tpu.memory_space<vmem>>, vector<1x8x384xf32>,
    %c1 = arith.constant 1 : index
    %c0_34 = arith.constant 0 : index
    %c0_35 = arith.constant 0 : index
    %103 = vector.load %arg1[%c1, %c0_34, %c0_35] : memref<2x4x512xbf16, #tpu.memory_space<vmem>>, vector<1x4x512xbf16>
    %104 = vector.shape_cast %103 : vector<1x4x512xbf16> to vector<4x512xbf16>
    %c1_36 = arith.constant 1 : index
    %c0_37 = arith.constant 0 : index
    %c0_38 = arith.constant 0 : index
    %105 = vector.load %arg2[%c1_36, %c0_37, %c0_38] : memref<2x4x512xbf16, #tpu.memory_space<vmem>>, vector<1x4x512xbf16>
    %106 = vector.shape_cast %105 : vector<1x4x512xbf16> to vector<4x512xbf16>
    %cst_39 = arith.constant 0.000000e+00 : f32
    %107 = vector.broadcast %cst_39 : f32 to vector<8x384xf32>
    %108 = vector.extract_strided_slice %0 {offsets = [0, 0, 0], sizes = [1, 8, 4], strides = [1, 1, 1]} : vector<9x8x4xbf16> to vector<1x8x4xbf16>
    %109 = vector.shape_cast %108 : vector<1x8x4xbf16> to vector<8x4xbf16>
    %110 = vector.extract_strided_slice %104 {offsets = [0, 0], sizes = [4, 384], strides = [1, 1]} : vector<4x512xbf16> to vector<4x384xbf16>
    %cst_40 = arith.constant dense<0.000000e+00> : vector<8x384xf32>
    %111 = tpu.matmul %109, %110, %cst_40 {dimension_numbers = #tpu.dot_dimension_numbers<[1], [0], [0], [1], [0, 0, 1, 1], [], []>} : vector<8x4xbf16>, vector<4x384xbf16>, vector<8x384xf32> -> vector<8x384xf32>
    %112 = arith.addf %107, %111 : vector<8x384xf32>
    %113 = vector.extract_strided_slice %1 {offsets = [0, 0, 0], sizes = [1, 8, 4], strides = [1, 1, 1]} : vector<9x8x4xbf16> to vector<1x8x4xbf16>
    %114 = vector.shape_cast %113 : vector<1x8x4xbf16> to vector<8x4xbf16>
    %115 = vector.extract_strided_slice %106 {offsets = [0, 0], sizes = [4, 384], strides = [1, 1]} : vector<4x512xbf16> to vector<4x384xbf16>
    %cst_41 = arith.constant dense<0.000000e+00> : vector<8x384xf32>
    %116 = tpu.matmul %114, %115, %cst_41 {dimension_numbers = #tpu.dot_dimension_numbers<[1], [0], [0], [1], [0, 0, 1, 1], [], []>} : vector<8x4xbf16>, vector<4x384xbf16>, vector<8x384xf32> -> vector<8x384xf32>
    %117 = arith.addf %112, %116 : vector<8x384xf32>
    %118 = vector.extract_strided_slice %0 {offsets = [1, 0, 0], sizes = [1, 8, 4], strides = [1, 1, 1]} : vector<9x8x4xbf16> to vector<1x8x4xbf16>
    %119 = vector.shape_cast %118 : vector<1x8x4xbf16> to vector<8x4xbf16>
    %120 = vector.extract_strided_slice %104 {offsets = [0, 1], sizes = [4, 384], strides = [1, 1]} : vector<4x512xbf16> to vector<4x384xbf16>
    %cst_42 = arith.constant dense<0.000000e+00> : vector<8x384xf32>
    %121 = tpu.matmul %119, %120, %cst_42 {dimension_numbers = #tpu.dot_dimension_numbers<[1], [0], [0], [1], [0, 0, 1, 1], [], []>} : vector<8x4xbf16>, vector<4x384xbf16>, vector<8x384xf32> -> vector<8x384xf32>
    %122 = arith.addf %117, %121 : vector<8x384xf32>
    %123 = vector.extract_strided_slice %1 {offsets = [1, 0, 0], sizes = [1, 8, 4], strides = [1, 1, 1]} : vector<9x8x4xbf16> to vector<1x8x4xbf16>
    %124 = vector.shape_cast %123 : vector<1x8x4xbf16> to vector<8x4xbf16>
    %125 = vector.extract_strided_slice %106 {offsets = [0, 1], sizes = [4, 384], strides = [1, 1]} : vector<4x512xbf16> to vector<4x384xbf16>
    %cst_43 = arith.constant dense<0.000000e+00> : vector<8x384xf32>
    %126 = tpu.matmul %124, %125, %cst_43 {dimension_numbers = #tpu.dot_dimension_numbers<[1], [0], [0], [1], [0, 0, 1, 1], [], []>} : vector<8x4xbf16>, vector<4x384xbf16>, vector<8x384xf32> -> vector<8x384xf32>
    %127 = arith.addf %122, %126 : vector<8x384xf32>
    %128 = vector.extract_strided_slice %0 {offsets = [2, 0, 0], sizes = [1, 8, 4], strides = [1, 1, 1]} : vector<9x8x4xbf16> to vector<1x8x4xbf16>
    %129 = vector.shape_cast %128 : vector<1x8x4xbf16> to vector<8x4xbf16>
    %130 = vector.extract_strided_slice %104 {offsets = [0, 2], sizes = [4, 384], strides = [1, 1]} : vector<4x512xbf16> to vector<4x384xbf16>
    %cst_44 = arith.constant dense<0.000000e+00> : vector<8x384xf32>
    %131 = tpu.matmul %129, %130, %cst_44 {dimension_numbers = #tpu.dot_dimension_numbers<[1], [0], [0], [1], [0, 0, 1, 1], [], []>} : vector<8x4xbf16>, vector<4x384xbf16>, vector<8x384xf32> -> vector<8x384xf32>
    %132 = arith.addf %127, %131 : vector<8x384xf32>
    %133 = vector.extract_strided_slice %1 {offsets = [2, 0, 0], sizes = [1, 8, 4], strides = [1, 1, 1]} : vector<9x8x4xbf16> to vector<1x8x4xbf16>
    %134 = vector.shape_cast %133 : vector<1x8x4xbf16> to vector<8x4xbf16>
    %135 = vector.extract_strided_slice %106 {offsets = [0, 2], sizes = [4, 384], strides = [1, 1]} : vector<4x512xbf16> to vector<4x384xbf16>
    %cst_45 = arith.constant dense<0.000000e+00> : vector<8x384xf32>
    %136 = tpu.matmul %134, %135, %cst_45 {dimension_numbers = #tpu.dot_dimension_numbers<[1], [0], [0], [1], [0, 0, 1, 1], [], []>} : vector<8x4xbf16>, vector<4x384xbf16>, vector<8x384xf32> -> vector<8x384xf32>
    %137 = arith.addf %132, %136 : vector<8x384xf32>
    %138 = vector.extract_strided_slice %0 {offsets = [3, 0, 0], sizes = [1, 8, 4], strides = [1, 1, 1]} : vector<9x8x4xbf16> to vector<1x8x4xbf16>
    %139 = vector.shape_cast %138 : vector<1x8x4xbf16> to vector<8x4xbf16>
    %140 = vector.extract_strided_slice %104 {offsets = [0, 18], sizes = [4, 384], strides = [1, 1]} : vector<4x512xbf16> to vector<4x384xbf16>
    %cst_46 = arith.constant dense<0.000000e+00> : vector<8x384xf32>
    %141 = tpu.matmul %139, %140, %cst_46 {dimension_numbers = #tpu.dot_dimension_numbers<[1], [0], [0], [1], [0, 0, 1, 1], [], []>} : vector<8x4xbf16>, vector<4x384xbf16>, vector<8x384xf32> -> vector<8x384xf32>
    %142 = arith.addf %137, %141 : vector<8x384xf32>
    %143 = vector.extract_strided_slice %1 {offsets = [3, 0, 0], sizes = [1, 8, 4], strides = [1, 1, 1]} : vector<9x8x4xbf16> to vector<1x8x4xbf16>
    %144 = vector.shape_cast %143 : vector<1x8x4xbf16> to vector<8x4xbf16>
    %145 = vector.extract_strided_slice %106 {offsets = [0, 18], sizes = [4, 384], strides = [1, 1]} : vector<4x512xbf16> to vector<4x384xbf16>
    %cst_47 = arith.constant dense<0.000000e+00> : vector<8x384xf32>
    %146 = tpu.matmul %144, %145, %cst_47 {dimension_numbers = #tpu.dot_dimension_numbers<[1], [0], [0], [1], [0, 0, 1, 1], [], []>} : vector<8x4xbf16>, vector<4x384xbf16>, vector<8x384xf32> -> vector<8x384xf32>
    %147 = arith.addf %142, %146 : vector<8x384xf32>
    %148 = vector.extract_strided_slice %0 {offsets = [4, 0, 0], sizes = [1, 8, 4], strides = [1, 1, 1]} : vector<9x8x4xbf16> to vector<1x8x4xbf16>
    %149 = vector.shape_cast %148 : vector<1x8x4xbf16> to vector<8x4xbf16>
    %150 = vector.extract_strided_slice %104 {offsets = [0, 19], sizes = [4, 384], strides = [1, 1]} : vector<4x512xbf16> to vector<4x384xbf16>
    %cst_48 = arith.constant dense<0.000000e+00> : vector<8x384xf32>
    %151 = tpu.matmul %149, %150, %cst_48 {dimension_numbers = #tpu.dot_dimension_numbers<[1], [0], [0], [1], [0, 0, 1, 1], [], []>} : vector<8x4xbf16>, vector<4x384xbf16>, vector<8x384xf32> -> vector<8x384xf32>
    %152 = arith.addf %147, %151 : vector<8x384xf32>
    %153 = vector.extract_strided_slice %1 {offsets = [4, 0, 0], sizes = [1, 8, 4], strides = [1, 1, 1]} : vector<9x8x4xbf16> to vector<1x8x4xbf16>
    %154 = vector.shape_cast %153 : vector<1x8x4xbf16> to vector<8x4xbf16>
    %155 = vector.extract_strided_slice %106 {offsets = [0, 19], sizes = [4, 384], strides = [1, 1]} : vector<4x512xbf16> to vector<4x384xbf16>
    %cst_49 = arith.constant dense<0.000000e+00> : vector<8x384xf32>
    %156 = tpu.matmul %154, %155, %cst_49 {dimension_numbers = #tpu.dot_dimension_numbers<[1], [0], [0], [1], [0, 0, 1, 1], [], []>} : vector<8x4xbf16>, vector<4x384xbf16>, vector<8x384xf32> -> vector<8x384xf32>
    %157 = arith.addf %152, %156 : vector<8x384xf32>
    %158 = vector.extract_strided_slice %0 {offsets = [5, 0, 0], sizes = [1, 8, 4], strides = [1, 1, 1]} : vector<9x8x4xbf16> to vector<1x8x4xbf16>
    %159 = vector.shape_cast %158 : vector<1x8x4xbf16> to vector<8x4xbf16>
    %160 = vector.extract_strided_slice %104 {offsets = [0, 20], sizes = [4, 384], strides = [1, 1]} : vector<4x512xbf16> to vector<4x384xbf16>
    %cst_50 = arith.constant dense<0.000000e+00> : vector<8x384xf32>
    %161 = tpu.matmul %159, %160, %cst_50 {dimension_numbers = #tpu.dot_dimension_numbers<[1], [0], [0], [1], [0, 0, 1, 1], [], []>} : vector<8x4xbf16>, vector<4x384xbf16>, vector<8x384xf32> -> vector<8x384xf32>
    %162 = arith.addf %157, %161 : vector<8x384xf32>
    %163 = vector.extract_strided_slice %1 {offsets = [5, 0, 0], sizes = [1, 8, 4], strides = [1, 1, 1]} : vector<9x8x4xbf16> to vector<1x8x4xbf16>
    %164 = vector.shape_cast %163 : vector<1x8x4xbf16> to vector<8x4xbf16>
    %165 = vector.extract_strided_slice %106 {offsets = [0, 20], sizes = [4, 384], strides = [1, 1]} : vector<4x512xbf16> to vector<4x384xbf16>
    %cst_51 = arith.constant dense<0.000000e+00> : vector<8x384xf32>
    %166 = tpu.matmul %164, %165, %cst_51 {dimension_numbers = #tpu.dot_dimension_numbers<[1], [0], [0], [1], [0, 0, 1, 1], [], []>} : vector<8x4xbf16>, vector<4x384xbf16>, vector<8x384xf32> -> vector<8x384xf32>
    %167 = arith.addf %162, %166 : vector<8x384xf32>
    %168 = vector.extract_strided_slice %0 {offsets = [6, 0, 0], sizes = [1, 8, 4], strides = [1, 1, 1]} : vector<9x8x4xbf16> to vector<1x8x4xbf16>
    %169 = vector.shape_cast %168 : vector<1x8x4xbf16> to vector<8x4xbf16>
    %170 = vector.extract_strided_slice %104 {offsets = [0, 36], sizes = [4, 384], strides = [1, 1]} : vector<4x512xbf16> to vector<4x384xbf16>
    %cst_52 = arith.constant dense<0.000000e+00> : vector<8x384xf32>
    %171 = tpu.matmul %169, %170, %cst_52 {dimension_numbers = #tpu.dot_dimension_numbers<[1], [0], [0], [1], [0, 0, 1, 1], [], []>} : vector<8x4xbf16>, vector<4x384xbf16>, vector<8x384xf32> -> vector<8x384xf32>
    %172 = arith.addf %167, %171 : vector<8x384xf32>
    %173 = vector.extract_strided_slice %1 {offsets = [6, 0, 0], sizes = [1, 8, 4], strides = [1, 1, 1]} : vector<9x8x4xbf16> to vector<1x8x4xbf16>
    %174 = vector.shape_cast %173 : vector<1x8x4xbf16> to vector<8x4xbf16>
    %175 = vector.extract_strided_slice %106 {offsets = [0, 36], sizes = [4, 384], strides = [1, 1]} : vector<4x512xbf16> to vector<4x384xbf16>
    %cst_53 = arith.constant dense<0.000000e+00> : vector<8x384xf32>
    %176 = tpu.matmul %174, %175, %cst_53 {dimension_numbers = #tpu.dot_dimension_numbers<[1], [0], [0], [1], [0, 0, 1, 1], [], []>} : vector<8x4xbf16>, vector<4x384xbf16>, vector<8x384xf32> -> vector<8x384xf32>
    %177 = arith.addf %172, %176 : vector<8x384xf32>
    %178 = vector.extract_strided_slice %0 {offsets = [7, 0, 0], sizes = [1, 8, 4], strides = [1, 1, 1]} : vector<9x8x4xbf16> to vector<1x8x4xbf16>
    %179 = vector.shape_cast %178 : vector<1x8x4xbf16> to vector<8x4xbf16>
    %180 = vector.extract_strided_slice %104 {offsets = [0, 37], sizes = [4, 384], strides = [1, 1]} : vector<4x512xbf16> to vector<4x384xbf16>
    %cst_54 = arith.constant dense<0.000000e+00> : vector<8x384xf32>
    %181 = tpu.matmul %179, %180, %cst_54 {dimension_numbers = #tpu.dot_dimension_numbers<[1], [0], [0], [1], [0, 0, 1, 1], [], []>} : vector<8x4xbf16>, vector<4x384xbf16>, vector<8x384xf32> -> vector<8x384xf32>
    %182 = arith.addf %177, %181 : vector<8x384xf32>
    %183 = vector.extract_strided_slice %1 {offsets = [7, 0, 0], sizes = [1, 8, 4], strides = [1, 1, 1]} : vector<9x8x4xbf16> to vector<1x8x4xbf16>
    %184 = vector.shape_cast %183 : vector<1x8x4xbf16> to vector<8x4xbf16>
    %185 = vector.extract_strided_slice %106 {offsets = [0, 37], sizes = [4, 384], strides = [1, 1]} : vector<4x512xbf16> to vector<4x384xbf16>
    %cst_55 = arith.constant dense<0.000000e+00> : vector<8x384xf32>
    %186 = tpu.matmul %184, %185, %cst_55 {dimension_numbers = #tpu.dot_dimension_numbers<[1], [0], [0], [1], [0, 0, 1, 1], [], []>} : vector<8x4xbf16>, vector<4x384xbf16>, vector<8x384xf32> -> vector<8x384xf32>
    %187 = arith.addf %182, %186 : vector<8x384xf32>
    %188 = vector.extract_strided_slice %0 {offsets = [8, 0, 0], sizes = [1, 8, 4], strides = [1, 1, 1]} : vector<9x8x4xbf16> to vector<1x8x4xbf16>
    %189 = vector.shape_cast %188 : vector<1x8x4xbf16> to vector<8x4xbf16>
    %190 = vector.extract_strided_slice %104 {offsets = [0, 38], sizes = [4, 384], strides = [1, 1]} : vector<4x512xbf16> to vector<4x384xbf16>
    %cst_56 = arith.constant dense<0.000000e+00> : vector<8x384xf32>
    %191 = tpu.matmul %189, %190, %cst_56 {dimension_numbers = #tpu.dot_dimension_numbers<[1], [0], [0], [1], [0, 0, 1, 1], [], []>} : vector<8x4xbf16>, vector<4x384xbf16>, vector<8x384xf32> -> vector<8x384xf32>
    %192 = arith.addf %187, %191 : vector<8x384xf32>
    %193 = vector.extract_strided_slice %1 {offsets = [8, 0, 0], sizes = [1, 8, 4], strides = [1, 1, 1]} : vector<9x8x4xbf16> to vector<1x8x4xbf16>
    %194 = vector.shape_cast %193 : vector<1x8x4xbf16> to vector<8x4xbf16>
    %195 = vector.extract_strided_slice %106 {offsets = [0, 38], sizes = [4, 384], strides = [1, 1]} : vector<4x512xbf16> to vector<4x384xbf16>
    %cst_57 = arith.constant dense<0.000000e+00> : vector<8x384xf32>
    %196 = tpu.matmul %194, %195, %cst_57 {dimension_numbers = #tpu.dot_dimension_numbers<[1], [0], [0], [1], [0, 0, 1, 1], [], []>} : vector<8x4xbf16>, vector<4x384xbf16>, vector<8x384xf32> -> vector<8x384xf32>
    %197 = arith.addf %192, %196 : vector<8x384xf32>
    %198 = vector.broadcast %2 : vector<8x1xf32> to vector<8x384xf32>
    %199 = arith.addf %197, %198 : vector<8x384xf32>
    %c1_58 = arith.constant 1 : index
    %c0_59 = arith.constant 0 : index
    %c0_60 = arith.constant 0 : index
    %200 = vector.load %arg6[%c1_58, %c0_59, %c0_60] : memref<2x8x384xf32, #tpu.memory_space<vmem>>, vector<1x8x384xf32>
    %201 = vector.shape_cast %200 : vector<1x8x384xf32> to vector<8x384xf32>
    %202 = vector.shape_cast %199 : vector<8x384xf32> to vector<1x8x384xf32>
    tpu.vector_store %arg6[%c1_58, %c0_59, %c0_60], %202 {strides = array<i32>} : memref<2x8x384xf32, #tpu.memory_space<vmem>>, vector<1x8x384xf32>,
    return
  }
  func.func @transform_0(%arg0: i32) -> (i32, i32, i32) {
    %c0_i32 = arith.constant 0 : i32
    %c0_i32_0 = arith.constant 0 : i32
    %c0_i32_1 = arith.constant 0 : i32
    return %arg0, %c0_i32, %c0_i32_0 : i32, i32, i32
  }
  func.func @transform_1(%arg0: i32) -> (i32, i32, i32) {
    %c0_i32 = arith.constant 0 : i32
    %c0_i32_0 = arith.constant 0 : i32
    %c0_i32_1 = arith.constant 0 : i32
    return %arg0, %c0_i32, %c0_i32_0 : i32, i32, i32
  }
  func.func @transform_2(%arg0: i32) -> (i32, i32, i32) {
    %c0_i32 = arith.constant 0 : i32
    %c0_i32_0 = arith.constant 0 : i32
    %c0_i32_1 = arith.constant 0 : i32
    %c0_i32_2 = arith.constant 0 : i32
    return %c0_i32, %c0_i32_0, %c0_i32_1 : i32, i32, i32
  }
  func.func @transform_3(%arg0: i32) -> (i32, i32, i32) {
    %c0_i32 = arith.constant 0 : i32
    %c0_i32_0 = arith.constant 0 : i32
    %c0_i32_1 = arith.constant 0 : i32
    %c0_i32_2 = arith.constant 0 : i32
    return %c0_i32, %c0_i32_0, %c0_i32_1 : i32, i32, i32
  }
  func.func @transform_4(%arg0: i32) -> (i32, i32) {
    %c0_i32 = arith.constant 0 : i32
    %c0_i32_0 = arith.constant 0 : i32
    %c0_i32_1 = arith.constant 0 : i32
    return %c0_i32, %c0_i32_0 : i32, i32
  }
  func.func @transform_5(%arg0: i32) -> (i32, i32, i32) {
    %c0_i32 = arith.constant 0 : i32
    %c0_i32_0 = arith.constant 0 : i32
    %c0_i32_1 = arith.constant 0 : i32
    return %arg0, %c0_i32, %c0_i32_0 : i32, i32, i32
  }
}

</mosaic_0001>

<llo_original>
// kernel: tpu_custom_call.1
$region0: #{tpu_custom_call.1}
  #allocation0 [shape = 'u32[]', space=smem, size = 0x4, offset = 0x4, fixed_abs, tag = 'smem constant byte address 0x4 - core index']
  #allocation1 [shape = 'u32[72,128]{1,0:T(1,128)}', space=vmem, size = 0x9000, scoped, tag = 'internal scratch']
  %s0 = inlined_call_operand.vmem [shape: bf16[2,4,512], index: 0, kind: input, shape index: {}]
  %s1 = inlined_call_operand.vmem [shape: bf16[2,4,512], index: 1, kind: input, shape index: {}]
  %s2 = inlined_call_operand.vmem [shape: bf16[9,8,4], index: 2, kind: input, shape index: {}]
  %s3 = inlined_call_operand.vmem [shape: bf16[9,8,4], index: 3, kind: input, shape index: {}]
  %s4 = inlined_call_operand.vmem [shape: f32[8,1], index: 4, kind: input, shape index: {}]
  %s5 = inlined_call_operand.hbm [shape: f32[2,8,384], index: 5, kind: output, shape index: {}]
  %s6 = sld [smem:[#allocation0]]
  $region30: #{tpu_custom_call.1} parent=0
    _
  %s8 = ssub.s32 1, %s6
  %s9 = scalar_select 0, %s8, %s6
  $region1: #{tpu_custom_call.1} parent=0
    #allocation2 [shape = 'u8[24576]{0}', space=vmem, size = 0x6000, scoped, tag = 'output window, operand 0, single buffered']
    #allocation3 [shape = 's32[1]{0}', space=sflag, size = 0x4, scoped, tag = 'scoped memory for tpu_custom_call.1']
    %10 = vsyncpa [#allocation3], 0
    // Predicated region
    $region2: #{tpu_custom_call.1} parent=1 // pred_check
      _
    $region3: #{tpu_custom_call.1} parent=1 // pred_check_branch
      %12 = sbr.rel (0) target = $region5
    $region4: #{tpu_custom_call.1} parent=1 // pred_region
      _
    $region5: #{tpu_custom_call.1} parent=1 // pred_fallthru
      _
    // Predicated region
    $region6: #{tpu_custom_call.1} parent=1 // pred_check
      _
    $region7: #{tpu_custom_call.1} parent=1 // pred_check_branch
      %14 = sbr.rel (0) target = $region9
    $region8: #{tpu_custom_call.1} parent=1 // pred_region
      _
    $region9: #{tpu_custom_call.1} parent=1 // pred_fallthru
      _
    // Predicated region
    $region10: #{tpu_custom_call.1} parent=1 // pred_check
      _
    $region11: #{tpu_custom_call.1} parent=1 // pred_check_branch
      %16 = sbr.rel (0) target = $region13
    $region12: #{tpu_custom_call.1} parent=1 // pred_region
      _
    $region13: #{tpu_custom_call.1} parent=1 // pred_fallthru
      _
    // Predicated region
    $region14: #{tpu_custom_call.1} parent=1 // pred_check
      _
    $region15: #{tpu_custom_call.1} parent=1 // pred_check_branch
      %18 = sbr.rel (0) target = $region17
    $region16: #{tpu_custom_call.1} parent=1 // pred_region
      _
    $region17: #{tpu_custom_call.1} parent=1 // pred_fallthru
      _
    // Predicated region
    $region18: #{tpu_custom_call.1} parent=1 // pred_check
      _
    $region19: #{tpu_custom_call.1} parent=1 // pred_check_branch
      %20 = sbr.rel (0) target = $region21
    $region20: #{tpu_custom_call.1} parent=1 // pred_region
      _
    $region21: #{tpu_custom_call.1} parent=1 // pred_fallthru
      _
    %v22 = vld [vmem:[%s2] sm:$0xf]
    %v23 = vld [vmem:[%s2 + $0x4] sm:$0xf]
    %v24 = vld [vmem:[%s2 + $0x8] sm:$0xf]
    %v25 = vld [vmem:[%s2 + $0xc] sm:$0xf]
    %v26 = vld [vmem:[%s2 + $0x10] sm:$0xf]
    %v27 = vld [vmem:[%s2 + $0x14] sm:$0xf]
    %v28 = vld [vmem:[%s2 + $0x18] sm:$0xf]
    %v29 = vld [vmem:[%s2 + $0x1c] sm:$0xf]
    %v30 = vld [vmem:[%s2 + $0x20] sm:$0xf]
    %v31 = vld [vmem:[%s3] sm:$0xf]
    %v32 = vld [vmem:[%s3 + $0x4] sm:$0xf]
    %v33 = vld [vmem:[%s3 + $0x8] sm:$0xf]
    %v34 = vld [vmem:[%s3 + $0xc] sm:$0xf]
    %v35 = vld [vmem:[%s3 + $0x10] sm:$0xf]
    %v36 = vld [vmem:[%s3 + $0x14] sm:$0xf]
    %v37 = vld [vmem:[%s3 + $0x18] sm:$0xf]
    %v38 = vld [vmem:[%s3 + $0x1c] sm:$0xf]
    %v39 = vld [vmem:[%s3 + $0x20] sm:$0xf]
    %v40 = vld [vmem:[%s4] sm:$0xff]
    %v41 = vld [vmem:[%s0] sm:$0xff]
    %v42 = vld [vmem:[%s1] sm:$0xff]
    %44 = vst [vmem:[#allocation1] ss:$4 sm:$0xff] %v42
    %v45 = vld.sshfl [vmem:[#allocation1] sm:$0xff pattern:$0x73625140]
    %v46 = vld.sshfl [vmem:[#allocation1 + $0x8] sm:$0xff pattern:$0x73625140]
    %v47 = vld.sshfl [vmem:[#allocation1 + $0x10] sm:$0xff pattern:$0x73625140]
    %vm48 = vcmask 31744
    %v50 = vsel %vm48, %v31, 0
    %vm52 = vcmask 1041408
    %v53 = vsel %vm52, %v45, 0
    %v55 = vsel %vm52, %v46, 0
    %v57 = vsel %vm52, %v47, 0
    %59 = vmatpush.bf16.msra.mxu0 0
    %60 = vmatpush.bf16.msra.mxu0 0
    %61 = vmatpush.bf16.msra.mxu0 0
    %62 = vmatpush.bf16.msra.mxu0 0
    %63 = vmatpush.bf16.msra.mxu0 0
    %64 = vmatpush.bf16.msra.mxu0 0
    %65 = vmatpush.bf16.msra.mxu0 0
    %66 = vmatpush.bf16.msra.mxu0 %v53
    %67 = vmatmul.bf16.gmra.mxu0 %v50
    %v68 = vpop.f32.mrf.mxu0
    %v69 = vadd.f32 0.0, %v68
    %v70 = vpop.f32.mrf.mxu0
    %71 = vdwg.mxu0
    %72 = vmatpush.bf16.msra.mxu0 0
    %73 = vmatpush.bf16.msra.mxu0 0
    %74 = vmatpush.bf16.msra.mxu0 0
    %75 = vmatpush.bf16.msra.mxu0 0
    %76 = vmatpush.bf16.msra.mxu0 0
    %77 = vmatpush.bf16.msra.mxu0 0
    %78 = vmatpush.bf16.msra.mxu0 0
    %79 = vmatpush.bf16.msra.mxu0 %v55
    %80 = vmatmul.bf16.gmra.mxu0 %v50
    %v81 = vpop.f32.mrf.mxu0
    %v82 = vadd.f32 0.0, %v81
    %v83 = vpop.f32.mrf.mxu0
    %84 = vdwg.mxu0
    %85 = vmatpush.bf16.msra.mxu0 0
    %86 = vmatpush.bf16.msra.mxu0 0
    %87 = vmatpush.bf16.msra.mxu0 0
    %88 = vmatpush.bf16.msra.mxu0 0
    %89 = vmatpush.bf16.msra.mxu0 0
    %90 = vmatpush.bf16.msra.mxu0 0
    %91 = vmatpush.bf16.msra.mxu0 0
    %92 = vmatpush.bf16.msra.mxu0 %v57
    %93 = vmatmul.bf16.gmra.mxu0 %v50
    %v94 = vpop.f32.mrf.mxu0
    %v95 = vadd.f32 0.0, %v94
    %v96 = vpop.f32.mrf.mxu0
    %97 = vdwg.mxu0
    %99 = vst [vmem:[#allocation1] ss:$4 sm:$0xff] %v41
    %v100 = vld.sshfl [vmem:[#allocation1] sm:$0xff pattern:$0x73625140]
    %v101 = vld.sshfl [vmem:[#allocation1 + $0x8] sm:$0xff pattern:$0x73625140]
    %v102 = vld.sshfl [vmem:[#allocation1 + $0x10] sm:$0xff pattern:$0x73625140]
    %v104 = vsel %vm48, %v22, 0
    %v106 = vsel %vm52, %v100, 0
    %v108 = vsel %vm52, %v101, 0
    %v110 = vsel %vm52, %v102, 0
    %112 = vmatpush.bf16.msra.mxu0 0
    %113 = vmatpush.bf16.msra.mxu0 0
    %114 = vmatpush.bf16.msra.mxu0 0
    %115 = vmatpush.bf16.msra.mxu0 0
    %116 = vmatpush.bf16.msra.mxu0 0
    %117 = vmatpush.bf16.msra.mxu0 0
    %118 = vmatpush.bf16.msra.mxu0 0
    %119 = vmatpush.bf16.msra.mxu0 %v106
    %120 = vmatmul.bf16.gmra.mxu0 %v104
    %v121 = vpop.f32.mrf.mxu0
    %v122 = vadd.f32 %v69, %v121
    %v123 = vpop.f32.mrf.mxu0
    %124 = vdwg.mxu0
    %125 = vmatpush.bf16.msra.mxu0 0
    %126 = vmatpush.bf16.msra.mxu0 0
    %127 = vmatpush.bf16.msra.mxu0 0
    %128 = vmatpush.bf16.msra.mxu0 0
    %129 = vmatpush.bf16.msra.mxu0 0
    %130 = vmatpush.bf16.msra.mxu0 0
    %131 = vmatpush.bf16.msra.mxu0 0
    %132 = vmatpush.bf16.msra.mxu0 %v108
    %133 = vmatmul.bf16.gmra.mxu0 %v104
    %v134 = vpop.f32.mrf.mxu0
    %v135 = vadd.f32 %v82, %v134
    %v136 = vpop.f32.mrf.mxu0
    %137 = vdwg.mxu0
    %138 = vmatpush.bf16.msra.mxu0 0
    %139 = vmatpush.bf16.msra.mxu0 0
    %140 = vmatpush.bf16.msra.mxu0 0
    %141 = vmatpush.bf16.msra.mxu0 0
    %142 = vmatpush.bf16.msra.mxu0 0
    %143 = vmatpush.bf16.msra.mxu0 0
    %144 = vmatpush.bf16.msra.mxu0 0
    %145 = vmatpush.bf16.msra.mxu0 %v110
    %146 = vmatmul.bf16.gmra.mxu0 %v104
    %v147 = vpop.f32.mrf.mxu0
    %v148 = vadd.f32 %v95, %v147
    %v149 = vpop.f32.mrf.mxu0
    %150 = vdwg.mxu0
    %151 = vst [vmem:[#allocation1] ss:$4 sm:$0xff] %v41
    %v152 = vld.sshfl [vmem:[#allocation1] sm:$0xff pattern:$0x73625140]
    %v154 = vld.sshfl [vmem:[#allocation1 + $0x8] sm:$0xff pattern:$0x73625140]
    %v156 = vld.sshfl [vmem:[#allocation1 + $0x10] sm:$0xff pattern:$0x73625140]
    %v158 = vld.sshfl [vmem:[#allocation1 + $0x18] sm:$0xff pattern:$0x73625140]
    %160 = vrot.lane.b32.xlu0 %v152, 127
    %v161 = vpop.permute.xlu0 %160
    %162 = vrot.lane.b32.xlu0 %v154, 127
    %v163 = vpop.permute.xlu0 %162
    %164 = vrot.lane.b32.xlu0 %v156, 127
    %v165 = vpop.permute.xlu0 %164
    %166 = vrot.lane.b32.xlu0 %v158, 127
    %v167 = vpop.permute.xlu0 %166
    %vm168 = vcmask 1039360
    %v169 = vsel %vm168, %v161, %v163
    %v170 = vsel %vm168, %v163, %v165
    %v171 = vsel %vm168, %v165, %v167
    %v173 = vsel %vm48, %v23, 0
    %v176 = vsel %vm52, %v169, 0
    %v179 = vsel %vm52, %v170, 0
    %v182 = vsel %vm52, %v171, 0
    %184 = vmatpush.bf16.msra.mxu0 0
    %185 = vmatpush.bf16.msra.mxu0 0
    %186 = vmatpush.bf16.msra.mxu0 0
    %187 = vmatpush.bf16.msra.mxu0 0
    %188 = vmatpush.bf16.msra.mxu0 0
    %189 = vmatpush.bf16.msra.mxu0 0
    %190 = vmatpush.bf16.msra.mxu0 0
    %191 = vmatpush.bf16.msra.mxu0 %v176
    %192 = vmatmul.bf16.gmra.mxu0 %v173
    %v193 = vpop.f32.mrf.mxu0
    %v194 = vadd.f32 0.0, %v193
    %v195 = vpop.f32.mrf.mxu0
    %196 = vdwg.mxu0
    %197 = vmatpush.bf16.msra.mxu0 0
    %198 = vmatpush.bf16.msra.mxu0 0
    %199 = vmatpush.bf16.msra.mxu0 0
    %200 = vmatpush.bf16.msra.mxu0 0
    %201 = vmatpush.bf16.msra.mxu0 0
    %202 = vmatpush.bf16.msra.mxu0 0
    %203 = vmatpush.bf16.msra.mxu0 0
    %204 = vmatpush.bf16.msra.mxu0 %v179
    %205 = vmatmul.bf16.gmra.mxu0 %v173
    %v206 = vpop.f32.mrf.mxu0
    %v207 = vadd.f32 0.0, %v206
    %v208 = vpop.f32.mrf.mxu0
    %209 = vdwg.mxu0
    %210 = vmatpush.bf16.msra.mxu0 0
    %211 = vmatpush.bf16.msra.mxu0 0
    %212 = vmatpush.bf16.msra.mxu0 0
    %213 = vmatpush.bf16.msra.mxu0 0
    %214 = vmatpush.bf16.msra.mxu0 0
    %215 = vmatpush.bf16.msra.mxu0 0
    %216 = vmatpush.bf16.msra.mxu0 0
    %217 = vmatpush.bf16.msra.mxu0 %v182
    %218 = vmatmul.bf16.gmra.mxu0 %v173
    %v219 = vpop.f32.mrf.mxu0
    %v220 = vadd.f32 0.0, %v219
    %v221 = vpop.f32.mrf.mxu0
    %222 = vdwg.mxu0
    %v223 = vadd.f32 %v122, %v194
    %v224 = vadd.f32 %v135, %v207
    %v225 = vadd.f32 %v148, %v220
    %226 = vst [vmem:[#allocation1] ss:$4 sm:$0xff] %v42
    %v227 = vld.sshfl [vmem:[#allocation1] sm:$0xff pattern:$0x73625140]
    %v229 = vld.sshfl [vmem:[#allocation1 + $0x8] sm:$0xff pattern:$0x73625140]
    %v231 = vld.sshfl [vmem:[#allocation1 + $0x10] sm:$0xff pattern:$0x73625140]
    %v233 = vld.sshfl [vmem:[#allocation1 + $0x18] sm:$0xff pattern:$0x73625140]
    %235 = vrot.lane.b32.xlu0 %v227, 127
    %v236 = vpop.permute.xlu0 %235
    %237 = vrot.lane.b32.xlu0 %v229, 127
    %v238 = vpop.permute.xlu0 %237
    %239 = vrot.lane.b32.xlu0 %v231, 127
    %v240 = vpop.permute.xlu0 %239
    %241 = vrot.lane.b32.xlu0 %v233, 127
    %v242 = vpop.permute.xlu0 %241
    %v243 = vsel %vm168, %v236, %v238
    %v244 = vsel %vm168, %v238, %v240
    %v245 = vsel %vm168, %v240, %v242
    %v247 = vsel %vm48, %v32, 0
    %v250 = vsel %vm52, %v243, 0
    %v253 = vsel %vm52, %v244, 0
    %v256 = vsel %vm52, %v245, 0
    %258 = vmatpush.bf16.msra.mxu0 0
    %259 = vmatpush.bf16.msra.mxu0 0
    %260 = vmatpush.bf16.msra.mxu0 0
    %261 = vmatpush.bf16.msra.mxu0 0
    %262 = vmatpush.bf16.msra.mxu0 0
    %263 = vmatpush.bf16.msra.mxu0 0
    %264 = vmatpush.bf16.msra.mxu0 0
    %265 = vmatpush.bf16.msra.mxu0 %v250
    %266 = vmatmul.bf16.gmra.mxu0 %v247
    %v267 = vpop.f32.mrf.mxu0
    %v268 = vadd.f32 0.0, %v267
    %v269 = vpop.f32.mrf.mxu0
    %270 = vdwg.mxu0
    %271 = vmatpush.bf16.msra.mxu0 0
    %272 = vmatpush.bf16.msra.mxu0 0
    %273 = vmatpush.bf16.msra.mxu0 0
    %274 = vmatpush.bf16.msra.mxu0 0
    %275 = vmatpush.bf16.msra.mxu0 0
    %276 = vmatpush.bf16.msra.mxu0 0
    %277 = vmatpush.bf16.msra.mxu0 0
    %278 = vmatpush.bf16.msra.mxu0 %v253
    %279 = vmatmul.bf16.gmra.mxu0 %v247
    %v280 = vpop.f32.mrf.mxu0
    %v281 = vadd.f32 0.0, %v280
    %v282 = vpop.f32.mrf.mxu0
    %283 = vdwg.mxu0
    %284 = vmatpush.bf16.msra.mxu0 0
    %285 = vmatpush.bf16.msra.mxu0 0
    %286 = vmatpush.bf16.msra.mxu0 0
    %287 = vmatpush.bf16.msra.mxu0 0
    %288 = vmatpush.bf16.msra.mxu0 0
    %289 = vmatpush.bf16.msra.mxu0 0
    %290 = vmatpush.bf16.msra.mxu0 0
    %291 = vmatpush.bf16.msra.mxu0 %v256
    %292 = vmatmul.bf16.gmra.mxu0 %v247
    %v293 = vpop.f32.mrf.mxu0
    %v294 = vadd.f32 0.0, %v293
    %v295 = vpop.f32.mrf.mxu0
    %296 = vdwg.mxu0
    %v297 = vadd.f32 %v223, %v268
    %v298 = vadd.f32 %v224, %v281
    %v299 = vadd.f32 %v225, %v294
    %300 = vst [vmem:[#allocation1] ss:$4 sm:$0xff] %v41
    %v301 = vld.sshfl [vmem:[#allocation1] sm:$0xff pattern:$0x73625140]
    %v303 = vld.sshfl [vmem:[#allocation1 + $0x8] sm:$0xff pattern:$0x73625140]
    %v305 = vld.sshfl [vmem:[#allocation1 + $0x10] sm:$0xff pattern:$0x73625140]
    %v307 = vld.sshfl [vmem:[#allocation1 + $0x18] sm:$0xff pattern:$0x73625140]
    %309 = vrot.lane.b32.xlu0 %v301, 126
    %v310 = vpop.permute.xlu0 %309
    %311 = vrot.lane.b32.xlu0 %v303, 126
    %v312 = vpop.permute.xlu0 %311
    %313 = vrot.lane.b32.xlu0 %v305, 126
    %v314 = vpop.permute.xlu0 %313
    %315 = vrot.lane.b32.xlu0 %v307, 126
    %v316 = vpop.permute.xlu0 %315
    %vm317 = vcmask 1031168
    %v318 = vsel %vm317, %v310, %v312
    %v319 = vsel %vm317, %v312, %v314
    %v320 = vsel %vm317, %v314, %v316
    %v322 = vsel %vm48, %v24, 0
    %v325 = vsel %vm52, %v318, 0
    %v328 = vsel %vm52, %v319, 0
    %v331 = vsel %vm52, %v320, 0
    %333 = vmatpush.bf16.msra.mxu0 0
    %334 = vmatpush.bf16.msra.mxu0 0
    %335 = vmatpush.bf16.msra.mxu0 0
    %336 = vmatpush.bf16.msra.mxu0 0
    %337 = vmatpush.bf16.msra.mxu0 0
    %338 = vmatpush.bf16.msra.mxu0 0
    %339 = vmatpush.bf16.msra.mxu0 0
    %340 = vmatpush.bf16.msra.mxu0 %v325
    %341 = vmatmul.bf16.gmra.mxu0 %v322
    %v342 = vpop.f32.mrf.mxu0
    %v343 = vadd.f32 0.0, %v342
    %v344 = vpop.f32.mrf.mxu0
    %345 = vdwg.mxu0
    %346 = vmatpush.bf16.msra.mxu0 0
    %347 = vmatpush.bf16.msra.mxu0 0
    %348 = vmatpush.bf16.msra.mxu0 0
    %349 = vmatpush.bf16.msra.mxu0 0
    %350 = vmatpush.bf16.msra.mxu0 0
    %351 = vmatpush.bf16.msra.mxu0 0
    %352 = vmatpush.bf16.msra.mxu0 0
    %353 = vmatpush.bf16.msra.mxu0 %v328
    %354 = vmatmul.bf16.gmra.mxu0 %v322
    %v355 = vpop.f32.mrf.mxu0
    %v356 = vadd.f32 0.0, %v355
    %v357 = vpop.f32.mrf.mxu0
    %358 = vdwg.mxu0
    %359 = vmatpush.bf16.msra.mxu0 0
    %360 = vmatpush.bf16.msra.mxu0 0
    %361 = vmatpush.bf16.msra.mxu0 0
    %362 = vmatpush.bf16.msra.mxu0 0
    %363 = vmatpush.bf16.msra.mxu0 0
    %364 = vmatpush.bf16.msra.mxu0 0
    %365 = vmatpush.bf16.msra.mxu0 0
    %366 = vmatpush.bf16.msra.mxu0 %v331
    %367 = vmatmul.bf16.gmra.mxu0 %v322
    %v368 = vpop.f32.mrf.mxu0
    %v369 = vadd.f32 0.0, %v368
    %v370 = vpop.f32.mrf.mxu0
    %371 = vdwg.mxu0
    %v372 = vadd.f32 %v297, %v343
    %v373 = vadd.f32 %v298, %v356
    %v374 = vadd.f32 %v299, %v369
    %375 = vst [vmem:[#allocation1] ss:$4 sm:$0xff] %v42
    %v376 = vld.sshfl [vmem:[#allocation1] sm:$0xff pattern:$0x73625140]
    %v378 = vld.sshfl [vmem:[#allocation1 + $0x8] sm:$0xff pattern:$0x73625140]
    %v380 = vld.sshfl [vmem:[#allocation1 + $0x10] sm:$0xff pattern:$0x73625140]
    %v382 = vld.sshfl [vmem:[#allocation1 + $0x18] sm:$0xff pattern:$0x73625140]
    %384 = vrot.lane.b32.xlu0 %v376, 126
    %v385 = vpop.permute.xlu0 %384
    %386 = vrot.lane.b32.xlu0 %v378, 126
    %v387 = vpop.permute.xlu0 %386
    %388 = vrot.lane.b32.xlu0 %v380, 126
    %v389 = vpop.permute.xlu0 %388
    %390 = vrot.lane.b32.xlu0 %v382, 126
    %v391 = vpop.permute.xlu0 %390
    %v392 = vsel %vm317, %v385, %v387
    %v393 = vsel %vm317, %v387, %v389
    %v394 = vsel %vm317, %v389, %v391
    %v396 = vsel %vm48, %v33, 0
    %v399 = vsel %vm52, %v392, 0
    %v402 = vsel %vm52, %v393, 0
    %v405 = vsel %vm52, %v394, 0
    %407 = vmatpush.bf16.msra.mxu0 0
    %408 = vmatpush.bf16.msra.mxu0 0
    %409 = vmatpush.bf16.msra.mxu0 0
    %410 = vmatpush.bf16.msra.mxu0 0
    %411 = vmatpush.bf16.msra.mxu0 0
    %412 = vmatpush.bf16.msra.mxu0 0
    %413 = vmatpush.bf16.msra.mxu0 0
    %414 = vmatpush.bf16.msra.mxu0 %v399
    %415 = vmatmul.bf16.gmra.mxu0 %v396
    %v416 = vpop.f32.mrf.mxu0
    %v417 = vadd.f32 0.0, %v416
    %v418 = vpop.f32.mrf.mxu0
    %419 = vdwg.mxu0
    %420 = vmatpush.bf16.msra.mxu0 0
    %421 = vmatpush.bf16.msra.mxu0 0
    %422 = vmatpush.bf16.msra.mxu0 0
    %423 = vmatpush.bf16.msra.mxu0 0
    %424 = vmatpush.bf16.msra.mxu0 0
    %425 = vmatpush.bf16.msra.mxu0 0
    %426 = vmatpush.bf16.msra.mxu0 0
    %427 = vmatpush.bf16.msra.mxu0 %v402
    %428 = vmatmul.bf16.gmra.mxu0 %v396
    %v429 = vpop.f32.mrf.mxu0
    %v430 = vadd.f32 0.0, %v429
    %v431 = vpop.f32.mrf.mxu0
    %432 = vdwg.mxu0
    %433 = vmatpush.bf16.msra.mxu0 0
    %434 = vmatpush.bf16.msra.mxu0 0
    %435 = vmatpush.bf16.msra.mxu0 0
    %436 = vmatpush.bf16.msra.mxu0 0
    %437 = vmatpush.bf16.msra.mxu0 0
    %438 = vmatpush.bf16.msra.mxu0 0
    %439 = vmatpush.bf16.msra.mxu0 0
    %440 = vmatpush.bf16.msra.mxu0 %v405
    %441 = vmatmul.bf16.gmra.mxu0 %v396
    %v442 = vpop.f32.mrf.mxu0
    %v443 = vadd.f32 0.0, %v442
    %v444 = vpop.f32.mrf.mxu0
    %445 = vdwg.mxu0
    %v446 = vadd.f32 %v372, %v417
    %v447 = vadd.f32 %v373, %v430
    %v448 = vadd.f32 %v374, %v443
    %449 = vst [vmem:[#allocation1] ss:$4 sm:$0xff] %v41
    %v450 = vld.sshfl [vmem:[#allocation1] sm:$0xff pattern:$0x73625140]
    %v452 = vld.sshfl [vmem:[#allocation1 + $0x8] sm:$0xff pattern:$0x73625140]
    %v454 = vld.sshfl [vmem:[#allocation1 + $0x10] sm:$0xff pattern:$0x73625140]
    %v456 = vld.sshfl [vmem:[#allocation1 + $0x18] sm:$0xff pattern:$0x73625140]
    %458 = vrot.lane.b32.xlu0 %v450, 110
    %v459 = vpop.permute.xlu0 %458
    %460 = vrot.lane.b32.xlu0 %v452, 110
    %v461 = vpop.permute.xlu0 %460
    %462 = vrot.lane.b32.xlu0 %v454, 110
    %v463 = vpop.permute.xlu0 %462
    %464 = vrot.lane.b32.xlu0 %v456, 110
    %v465 = vpop.permute.xlu0 %464
    %vm466 = vcmask 900096
    %v467 = vsel %vm466, %v459, %v461
    %v468 = vsel %vm466, %v461, %v463
    %v469 = vsel %vm466, %v463, %v465
    %v471 = vsel %vm48, %v25, 0
    %v474 = vsel %vm52, %v467, 0
    %v477 = vsel %vm52, %v468, 0
    %v480 = vsel %vm52, %v469, 0
    %482 = vmatpush.bf16.msra.mxu0 0
    %483 = vmatpush.bf16.msra.mxu0 0
    %484 = vmatpush.bf16.msra.mxu0 0
    %485 = vmatpush.bf16.msra.mxu0 0
    %486 = vmatpush.bf16.msra.mxu0 0
    %487 = vmatpush.bf16.msra.mxu0 0
    %488 = vmatpush.bf16.msra.mxu0 0
    %489 = vmatpush.bf16.msra.mxu0 %v474
    %490 = vmatmul.bf16.gmra.mxu0 %v471
    %v491 = vpop.f32.mrf.mxu0
    %v492 = vadd.f32 0.0, %v491
    %v493 = vpop.f32.mrf.mxu0
    %494 = vdwg.mxu0
    %495 = vmatpush.bf16.msra.mxu0 0
    %496 = vmatpush.bf16.msra.mxu0 0
    %497 = vmatpush.bf16.msra.mxu0 0
    %498 = vmatpush.bf16.msra.mxu0 0
    %499 = vmatpush.bf16.msra.mxu0 0
    %500 = vmatpush.bf16.msra.mxu0 0
    %501 = vmatpush.bf16.msra.mxu0 0
    %502 = vmatpush.bf16.msra.mxu0 %v477
    %503 = vmatmul.bf16.gmra.mxu0 %v471
    %v504 = vpop.f32.mrf.mxu0
    %v505 = vadd.f32 0.0, %v504
    %v506 = vpop.f32.mrf.mxu0
    %507 = vdwg.mxu0
    %508 = vmatpush.bf16.msra.mxu0 0
    %509 = vmatpush.bf16.msra.mxu0 0
    %510 = vmatpush.bf16.msra.mxu0 0
    %511 = vmatpush.bf16.msra.mxu0 0
    %512 = vmatpush.bf16.msra.mxu0 0
    %513 = vmatpush.bf16.msra.mxu0 0
    %514 = vmatpush.bf16.msra.mxu0 0
    %515 = vmatpush.bf16.msra.mxu0 %v480
    %516 = vmatmul.bf16.gmra.mxu0 %v471
    %v517 = vpop.f32.mrf.mxu0
    %v518 = vadd.f32 0.0, %v517
    %v519 = vpop.f32.mrf.mxu0
    %520 = vdwg.mxu0
    %v521 = vadd.f32 %v446, %v492
    %v522 = vadd.f32 %v447, %v505
    %v523 = vadd.f32 %v448, %v518
    %524 = vst [vmem:[#allocation1] ss:$4 sm:$0xff] %v42
    %v525 = vld.sshfl [vmem:[#allocation1] sm:$0xff pattern:$0x73625140]
    %v527 = vld.sshfl [vmem:[#allocation1 + $0x8] sm:$0xff pattern:$0x73625140]
    %v529 = vld.sshfl [vmem:[#allocation1 + $0x10] sm:$0xff pattern:$0x73625140]
    %v531 = vld.sshfl [vmem:[#allocation1 + $0x18] sm:$0xff pattern:$0x73625140]
    %533 = vrot.lane.b32.xlu0 %v525, 110
    %v534 = vpop.permute.xlu0 %533
    %535 = vrot.lane.b32.xlu0 %v527, 110
    %v536 = vpop.permute.xlu0 %535
    %537 = vrot.lane.b32.xlu0 %v529, 110
    %v538 = vpop.permute.xlu0 %537
    %539 = vrot.lane.b32.xlu0 %v531, 110
    %v540 = vpop.permute.xlu0 %539
    %v541 = vsel %vm466, %v534, %v536
    %v542 = vsel %vm466, %v536, %v538
    %v543 = vsel %vm466, %v538, %v540
    %v545 = vsel %vm48, %v34, 0
    %v548 = vsel %vm52, %v541, 0
    %v551 = vsel %vm52, %v542, 0
    %v554 = vsel %vm52, %v543, 0
    %556 = vmatpush.bf16.msra.mxu0 0
    %557 = vmatpush.bf16.msra.mxu0 0
    %558 = vmatpush.bf16.msra.mxu0 0
    %559 = vmatpush.bf16.msra.mxu0 0
    %560 = vmatpush.bf16.msra.mxu0 0
    %561 = vmatpush.bf16.msra.mxu0 0
    %562 = vmatpush.bf16.msra.mxu0 0
    %563 = vmatpush.bf16.msra.mxu0 %v548
    %564 = vmatmul.bf16.gmra.mxu0 %v545
    %v565 = vpop.f32.mrf.mxu0
    %v566 = vadd.f32 0.0, %v565
    %v567 = vpop.f32.mrf.mxu0
    %568 = vdwg.mxu0
    %569 = vmatpush.bf16.msra.mxu0 0
    %570 = vmatpush.bf16.msra.mxu0 0
    %571 = vmatpush.bf16.msra.mxu0 0
    %572 = vmatpush.bf16.msra.mxu0 0
    %573 = vmatpush.bf16.msra.mxu0 0
    %574 = vmatpush.bf16.msra.mxu0 0
    %575 = vmatpush.bf16.msra.mxu0 0
    %576 = vmatpush.bf16.msra.mxu0 %v551
    %577 = vmatmul.bf16.gmra.mxu0 %v545
    %v578 = vpop.f32.mrf.mxu0
    %v579 = vadd.f32 0.0, %v578
    %v580 = vpop.f32.mrf.mxu0
    %581 = vdwg.mxu0
    %582 = vmatpush.bf16.msra.mxu0 0
    %583 = vmatpush.bf16.msra.mxu0 0
    %584 = vmatpush.bf16.msra.mxu0 0
    %585 = vmatpush.bf16.msra.mxu0 0
    %586 = vmatpush.bf16.msra.mxu0 0
    %587 = vmatpush.bf16.msra.mxu0 0
    %588 = vmatpush.bf16.msra.mxu0 0
    %589 = vmatpush.bf16.msra.mxu0 %v554
    %590 = vmatmul.bf16.gmra.mxu0 %v545
    %v591 = vpop.f32.mrf.mxu0
    %v592 = vadd.f32 0.0, %v591
    %v593 = vpop.f32.mrf.mxu0
    %594 = vdwg.mxu0
    %v595 = vadd.f32 %v521, %v566
    %v596 = vadd.f32 %v522, %v579
    %v597 = vadd.f32 %v523, %v592
    %598 = vst [vmem:[#allocation1] ss:$4 sm:$0xff] %v41
    %v599 = vld.sshfl [vmem:[#allocation1] sm:$0xff pattern:$0x73625140]
    %v601 = vld.sshfl [vmem:[#allocation1 + $0x8] sm:$0xff pattern:$0x73625140]
    %v603 = vld.sshfl [vmem:[#allocation1 + $0x10] sm:$0xff pattern:$0x73625140]
    %v605 = vld.sshfl [vmem:[#allocation1 + $0x18] sm:$0xff pattern:$0x73625140]
    %607 = vrot.lane.b32.xlu0 %v599, 109
    %v608 = vpop.permute.xlu0 %607
    %609 = vrot.lane.b32.xlu0 %v601, 109
    %v610 = vpop.permute.xlu0 %609
    %611 = vrot.lane.b32.xlu0 %v603, 109
    %v612 = vpop.permute.xlu0 %611
    %613 = vrot.lane.b32.xlu0 %v605, 109
    %v614 = vpop.permute.xlu0 %613
    %vm615 = vcmask 891904
    %v616 = vsel %vm615, %v608, %v610
    %v617 = vsel %vm615, %v610, %v612
    %v618 = vsel %vm615, %v612, %v614
    %v620 = vsel %vm48, %v26, 0
    %v623 = vsel %vm52, %v616, 0
    %v626 = vsel %vm52, %v617, 0
    %v629 = vsel %vm52, %v618, 0
    %631 = vmatpush.bf16.msra.mxu0 0
    %632 = vmatpush.bf16.msra.mxu0 0
    %633 = vmatpush.bf16.msra.mxu0 0
    %634 = vmatpush.bf16.msra.mxu0 0
    %635 = vmatpush.bf16.msra.mxu0 0
    %636 = vmatpush.bf16.msra.mxu0 0
    %637 = vmatpush.bf16.msra.mxu0 0
    %638 = vmatpush.bf16.msra.mxu0 %v623
    %639 = vmatmul.bf16.gmra.mxu0 %v620
    %v640 = vpop.f32.mrf.mxu0
    %v641 = vadd.f32 0.0, %v640
    %v642 = vpop.f32.mrf.mxu0
    %643 = vdwg.mxu0
    %644 = vmatpush.bf16.msra.mxu0 0
    %645 = vmatpush.bf16.msra.mxu0 0
    %646 = vmatpush.bf16.msra.mxu0 0
    %647 = vmatpush.bf16.msra.mxu0 0
    %648 = vmatpush.bf16.msra.mxu0 0
    %649 = vmatpush.bf16.msra.mxu0 0
    %650 = vmatpush.bf16.msra.mxu0 0
    %651 = vmatpush.bf16.msra.mxu0 %v626
    %652 = vmatmul.bf16.gmra.mxu0 %v620
    %v653 = vpop.f32.mrf.mxu0
    %v654 = vadd.f32 0.0, %v653
    %v655 = vpop.f32.mrf.mxu0
    %656 = vdwg.mxu0
    %657 = vmatpush.bf16.msra.mxu0 0
    %658 = vmatpush.bf16.msra.mxu0 0
    %659 = vmatpush.bf16.msra.mxu0 0
    %660 = vmatpush.bf16.msra.mxu0 0
    %661 = vmatpush.bf16.msra.mxu0 0
    %662 = vmatpush.bf16.msra.mxu0 0
    %663 = vmatpush.bf16.msra.mxu0 0
    %664 = vmatpush.bf16.msra.mxu0 %v629
    %665 = vmatmul.bf16.gmra.mxu0 %v620
    %v666 = vpop.f32.mrf.mxu0
    %v667 = vadd.f32 0.0, %v666
    %v668 = vpop.f32.mrf.mxu0
    %669 = vdwg.mxu0
    %v670 = vadd.f32 %v595, %v641
    %v671 = vadd.f32 %v596, %v654
    %v672 = vadd.f32 %v597, %v667
    %673 = vst [vmem:[#allocation1] ss:$4 sm:$0xff] %v42
    %v674 = vld.sshfl [vmem:[#allocation1] sm:$0xff pattern:$0x73625140]
    %v676 = vld.sshfl [vmem:[#allocation1 + $0x8] sm:$0xff pattern:$0x73625140]
    %v678 = vld.sshfl [vmem:[#allocation1 + $0x10] sm:$0xff pattern:$0x73625140]
    %v680 = vld.sshfl [vmem:[#allocation1 + $0x18] sm:$0xff pattern:$0x73625140]
    %682 = vrot.lane.b32.xlu0 %v674, 109
    %v683 = vpop.permute.xlu0 %682
    %684 = vrot.lane.b32.xlu0 %v676, 109
    %v685 = vpop.permute.xlu0 %684
    %686 = vrot.lane.b32.xlu0 %v678, 109
    %v687 = vpop.permute.xlu0 %686
    %688 = vrot.lane.b32.xlu0 %v680, 109
    %v689 = vpop.permute.xlu0 %688
    %v690 = vsel %vm615, %v683, %v685
    %v691 = vsel %vm615, %v685, %v687
    %v692 = vsel %vm615, %v687, %v689
    %v694 = vsel %vm48, %v35, 0
    %v697 = vsel %vm52, %v690, 0
    %v700 = vsel %vm52, %v691, 0
    %v703 = vsel %vm52, %v692, 0
    %705 = vmatpush.bf16.msra.mxu0 0
    %706 = vmatpush.bf16.msra.mxu0 0
    %707 = vmatpush.bf16.msra.mxu0 0
    %708 = vmatpush.bf16.msra.mxu0 0
    %709 = vmatpush.bf16.msra.mxu0 0
    %710 = vmatpush.bf16.msra.mxu0 0
    %711 = vmatpush.bf16.msra.mxu0 0
    %712 = vmatpush.bf16.msra.mxu0 %v697
    %713 = vmatmul.bf16.gmra.mxu0 %v694
    %v714 = vpop.f32.mrf.mxu0
    %v715 = vadd.f32 0.0, %v714
    %v716 = vpop.f32.mrf.mxu0
    %717 = vdwg.mxu0
    %718 = vmatpush.bf16.msra.mxu0 0
    %719 = vmatpush.bf16.msra.mxu0 0
    %720 = vmatpush.bf16.msra.mxu0 0
    %721 = vmatpush.bf16.msra.mxu0 0
    %722 = vmatpush.bf16.msra.mxu0 0
    %723 = vmatpush.bf16.msra.mxu0 0
    %724 = vmatpush.bf16.msra.mxu0 0
    %725 = vmatpush.bf16.msra.mxu0 %v700
    %726 = vmatmul.bf16.gmra.mxu0 %v694
    %v727 = vpop.f32.mrf.mxu0
    %v728 = vadd.f32 0.0, %v727
    %v729 = vpop.f32.mrf.mxu0
    %730 = vdwg.mxu0
    %731 = vmatpush.bf16.msra.mxu0 0
    %732 = vmatpush.bf16.msra.mxu0 0
    %733 = vmatpush.bf16.msra.mxu0 0
    %734 = vmatpush.bf16.msra.mxu0 0
    %735 = vmatpush.bf16.msra.mxu0 0
    %736 = vmatpush.bf16.msra.mxu0 0
    %737 = vmatpush.bf16.msra.mxu0 0
    %738 = vmatpush.bf16.msra.mxu0 %v703
    %739 = vmatmul.bf16.gmra.mxu0 %v694
    %v740 = vpop.f32.mrf.mxu0
    %v741 = vadd.f32 0.0, %v740
    %v742 = vpop.f32.mrf.mxu0
    %743 = vdwg.mxu0
    %v744 = vadd.f32 %v670, %v715
    %v745 = vadd.f32 %v671, %v728
    %v746 = vadd.f32 %v672, %v741
    %747 = vst [vmem:[#allocation1] ss:$4 sm:$0xff] %v41
    %v748 = vld.sshfl [vmem:[#allocation1] sm:$0xff pattern:$0x73625140]
    %v750 = vld.sshfl [vmem:[#allocation1 + $0x8] sm:$0xff pattern:$0x73625140]
    %v752 = vld.sshfl [vmem:[#allocation1 + $0x10] sm:$0xff pattern:$0x73625140]
    %v754 = vld.sshfl [vmem:[#allocation1 + $0x18] sm:$0xff pattern:$0x73625140]
    %756 = vrot.lane.b32.xlu0 %v748, 108
    %v757 = vpop.permute.xlu0 %756
    %758 = vrot.lane.b32.xlu0 %v750, 108
    %v759 = vpop.permute.xlu0 %758
    %760 = vrot.lane.b32.xlu0 %v752, 108
    %v761 = vpop.permute.xlu0 %760
    %762 = vrot.lane.b32.xlu0 %v754, 108
    %v763 = vpop.permute.xlu0 %762
    %vm764 = vcmask 883712
    %v765 = vsel %vm764, %v757, %v759
    %v766 = vsel %vm764, %v759, %v761
    %v767 = vsel %vm764, %v761, %v763
    %v769 = vsel %vm48, %v27, 0
    %v772 = vsel %vm52, %v765, 0
    %v775 = vsel %vm52, %v766, 0
    %v778 = vsel %vm52, %v767, 0
    %780 = vmatpush.bf16.msra.mxu0 0
    %781 = vmatpush.bf16.msra.mxu0 0
    %782 = vmatpush.bf16.msra.mxu0 0
    %783 = vmatpush.bf16.msra.mxu0 0
    %784 = vmatpush.bf16.msra.mxu0 0
    %785 = vmatpush.bf16.msra.mxu0 0
    %786 = vmatpush.bf16.msra.mxu0 0
    %787 = vmatpush.bf16.msra.mxu0 %v772
    %788 = vmatmul.bf16.gmra.mxu0 %v769
    %v789 = vpop.f32.mrf.mxu0
    %v790 = vadd.f32 0.0, %v789
    %v791 = vpop.f32.mrf.mxu0
    %792 = vdwg.mxu0
    %793 = vmatpush.bf16.msra.mxu0 0
    %794 = vmatpush.bf16.msra.mxu0 0
    %795 = vmatpush.bf16.msra.mxu0 0
    %796 = vmatpush.bf16.msra.mxu0 0
    %797 = vmatpush.bf16.msra.mxu0 0
    %798 = vmatpush.bf16.msra.mxu0 0
    %799 = vmatpush.bf16.msra.mxu0 0
    %800 = vmatpush.bf16.msra.mxu0 %v775
    %801 = vmatmul.bf16.gmra.mxu0 %v769
    %v802 = vpop.f32.mrf.mxu0
    %v803 = vadd.f32 0.0, %v802
    %v804 = vpop.f32.mrf.mxu0
    %805 = vdwg.mxu0
    %806 = vmatpush.bf16.msra.mxu0 0
    %807 = vmatpush.bf16.msra.mxu0 0
    %808 = vmatpush.bf16.msra.mxu0 0
    %809 = vmatpush.bf16.msra.mxu0 0
    %810 = vmatpush.bf16.msra.mxu0 0
    %811 = vmatpush.bf16.msra.mxu0 0
    %812 = vmatpush.bf16.msra.mxu0 0
    %813 = vmatpush.bf16.msra.mxu0 %v778
    %814 = vmatmul.bf16.gmra.mxu0 %v769
    %v815 = vpop.f32.mrf.mxu0
    %v816 = vadd.f32 0.0, %v815
    %v817 = vpop.f32.mrf.mxu0
    %818 = vdwg.mxu0
    %v819 = vadd.f32 %v744, %v790
    %v820 = vadd.f32 %v745, %v803
    %v821 = vadd.f32 %v746, %v816
    %822 = vst [vmem:[#allocation1] ss:$4 sm:$0xff] %v42
    %v823 = vld.sshfl [vmem:[#allocation1] sm:$0xff pattern:$0x73625140]
    %v825 = vld.sshfl [vmem:[#allocation1 + $0x8] sm:$0xff pattern:$0x73625140]
    %v827 = vld.sshfl [vmem:[#allocation1 + $0x10] sm:$0xff pattern:$0x73625140]
    %v829 = vld.sshfl [vmem:[#allocation1 + $0x18] sm:$0xff pattern:$0x73625140]
    %831 = vrot.lane.b32.xlu0 %v823, 108
    %v832 = vpop.permute.xlu0 %831
    %833 = vrot.lane.b32.xlu0 %v825, 108
    %v834 = vpop.permute.xlu0 %833
    %835 = vrot.lane.b32.xlu0 %v827, 108
    %v836 = vpop.permute.xlu0 %835
    %837 = vrot.lane.b32.xlu0 %v829, 108
    %v838 = vpop.permute.xlu0 %837
    %v839 = vsel %vm764, %v832, %v834
    %v840 = vsel %vm764, %v834, %v836
    %v841 = vsel %vm764, %v836, %v838
    %v843 = vsel %vm48, %v36, 0
    %v846 = vsel %vm52, %v839, 0
    %v849 = vsel %vm52, %v840, 0
    %v852 = vsel %vm52, %v841, 0
    %854 = vmatpush.bf16.msra.mxu0 0
    %855 = vmatpush.bf16.msra.mxu0 0
    %856 = vmatpush.bf16.msra.mxu0 0
    %857 = vmatpush.bf16.msra.mxu0 0
    %858 = vmatpush.bf16.msra.mxu0 0
    %859 = vmatpush.bf16.msra.mxu0 0
    %860 = vmatpush.bf16.msra.mxu0 0
    %861 = vmatpush.bf16.msra.mxu0 %v846
    %862 = vmatmul.bf16.gmra.mxu0 %v843
    %v863 = vpop.f32.mrf.mxu0
    %v864 = vadd.f32 0.0, %v863
    %v865 = vpop.f32.mrf.mxu0
    %866 = vdwg.mxu0
    %867 = vmatpush.bf16.msra.mxu0 0
    %868 = vmatpush.bf16.msra.mxu0 0
    %869 = vmatpush.bf16.msra.mxu0 0
    %870 = vmatpush.bf16.msra.mxu0 0
    %871 = vmatpush.bf16.msra.mxu0 0
    %872 = vmatpush.bf16.msra.mxu0 0
    %873 = vmatpush.bf16.msra.mxu0 0
    %874 = vmatpush.bf16.msra.mxu0 %v849
    %875 = vmatmul.bf16.gmra.mxu0 %v843
    %v876 = vpop.f32.mrf.mxu0
    %v877 = vadd.f32 0.0, %v876
    %v878 = vpop.f32.mrf.mxu0
    %879 = vdwg.mxu0
    %880 = vmatpush.bf16.msra.mxu0 0
    %881 = vmatpush.bf16.msra.mxu0 0
    %882 = vmatpush.bf16.msra.mxu0 0
    %883 = vmatpush.bf16.msra.mxu0 0
    %884 = vmatpush.bf16.msra.mxu0 0
    %885 = vmatpush.bf16.msra.mxu0 0
    %886 = vmatpush.bf16.msra.mxu0 0
    %887 = vmatpush.bf16.msra.mxu0 %v852
    %888 = vmatmul.bf16.gmra.mxu0 %v843
    %v889 = vpop.f32.mrf.mxu0
    %v890 = vadd.f32 0.0, %v889
    %v891 = vpop.f32.mrf.mxu0
    %892 = vdwg.mxu0
    %v893 = vadd.f32 %v819, %v864
    %v894 = vadd.f32 %v820, %v877
    %v895 = vadd.f32 %v821, %v890
    %896 = vst [vmem:[#allocation1] ss:$4 sm:$0xff] %v41
    %v897 = vld.sshfl [vmem:[#allocation1] sm:$0xff pattern:$0x73625140]
    %v899 = vld.sshfl [vmem:[#allocation1 + $0x8] sm:$0xff pattern:$0x73625140]
    %v901 = vld.sshfl [vmem:[#allocation1 + $0x10] sm:$0xff pattern:$0x73625140]
    %v903 = vld.sshfl [vmem:[#allocation1 + $0x18] sm:$0xff pattern:$0x73625140]
    %905 = vrot.lane.b32.xlu0 %v897, 92
    %v906 = vpop.permute.xlu0 %905
    %907 = vrot.lane.b32.xlu0 %v899, 92
    %v908 = vpop.permute.xlu0 %907
    %909 = vrot.lane.b32.xlu0 %v901, 92
    %v910 = vpop.permute.xlu0 %909
    %911 = vrot.lane.b32.xlu0 %v903, 92
    %v912 = vpop.permute.xlu0 %911
    %vm913 = vcmask 752640
    %v914 = vsel %vm913, %v906, %v908
    %v915 = vsel %vm913, %v908, %v910
    %v916 = vsel %vm913, %v910, %v912
    %v918 = vsel %vm48, %v28, 0
    %v921 = vsel %vm52, %v914, 0
    %v924 = vsel %vm52, %v915, 0
    %v927 = vsel %vm52, %v916, 0
    %929 = vmatpush.bf16.msra.mxu0 0
    %930 = vmatpush.bf16.msra.mxu0 0
    %931 = vmatpush.bf16.msra.mxu0 0
    %932 = vmatpush.bf16.msra.mxu0 0
    %933 = vmatpush.bf16.msra.mxu0 0
    %934 = vmatpush.bf16.msra.mxu0 0
    %935 = vmatpush.bf16.msra.mxu0 0
    %936 = vmatpush.bf16.msra.mxu0 %v921
    %937 = vmatmul.bf16.gmra.mxu0 %v918
    %v938 = vpop.f32.mrf.mxu0
    %v939 = vadd.f32 0.0, %v938
    %v940 = vpop.f32.mrf.mxu0
    %941 = vdwg.mxu0
    %942 = vmatpush.bf16.msra.mxu0 0
    %943 = vmatpush.bf16.msra.mxu0 0
    %944 = vmatpush.bf16.msra.mxu0 0
    %945 = vmatpush.bf16.msra.mxu0 0
    %946 = vmatpush.bf16.msra.mxu0 0
    %947 = vmatpush.bf16.msra.mxu0 0
    %948 = vmatpush.bf16.msra.mxu0 0
    %949 = vmatpush.bf16.msra.mxu0 %v924
    %950 = vmatmul.bf16.gmra.mxu0 %v918
    %v951 = vpop.f32.mrf.mxu0
    %v952 = vadd.f32 0.0, %v951
    %v953 = vpop.f32.mrf.mxu0
    %954 = vdwg.mxu0
    %955 = vmatpush.bf16.msra.mxu0 0
    %956 = vmatpush.bf16.msra.mxu0 0
    %957 = vmatpush.bf16.msra.mxu0 0
    %958 = vmatpush.bf16.msra.mxu0 0
    %959 = vmatpush.bf16.msra.mxu0 0
    %960 = vmatpush.bf16.msra.mxu0 0
    %961 = vmatpush.bf16.msra.mxu0 0
    %962 = vmatpush.bf16.msra.mxu0 %v927
    %963 = vmatmul.bf16.gmra.mxu0 %v918
    %v964 = vpop.f32.mrf.mxu0
    %v965 = vadd.f32 0.0, %v964
    %v966 = vpop.f32.mrf.mxu0
    %967 = vdwg.mxu0
    %v968 = vadd.f32 %v893, %v939
    %v969 = vadd.f32 %v894, %v952
    %v970 = vadd.f32 %v895, %v965
    %971 = vst [vmem:[#allocation1] ss:$4 sm:$0xff] %v42
    %v972 = vld.sshfl [vmem:[#allocation1] sm:$0xff pattern:$0x73625140]
    %v974 = vld.sshfl [vmem:[#allocation1 + $0x8] sm:$0xff pattern:$0x73625140]
    %v976 = vld.sshfl [vmem:[#allocation1 + $0x10] sm:$0xff pattern:$0x73625140]
    %v978 = vld.sshfl [vmem:[#allocation1 + $0x18] sm:$0xff pattern:$0x73625140]
    %980 = vrot.lane.b32.xlu0 %v972, 92
    %v981 = vpop.permute.xlu0 %980
    %982 = vrot.lane.b32.xlu0 %v974, 92
    %v983 = vpop.permute.xlu0 %982
    %984 = vrot.lane.b32.xlu0 %v976, 92
    %v985 = vpop.permute.xlu0 %984
    %986 = vrot.lane.b32.xlu0 %v978, 92
    %v987 = vpop.permute.xlu0 %986
    %v988 = vsel %vm913, %v981, %v983
    %v989 = vsel %vm913, %v983, %v985
    %v990 = vsel %vm913, %v985, %v987
    %v992 = vsel %vm48, %v37, 0
    %v995 = vsel %vm52, %v988, 0
    %v998 = vsel %vm52, %v989, 0
    %v1001 = vsel %vm52, %v990, 0
    %1003 = vmatpush.bf16.msra.mxu0 0
    %1004 = vmatpush.bf16.msra.mxu0 0
    %1005 = vmatpush.bf16.msra.mxu0 0
    %1006 = vmatpush.bf16.msra.mxu0 0
    %1007 = vmatpush.bf16.msra.mxu0 0
    %1008 = vmatpush.bf16.msra.mxu0 0
    %1009 = vmatpush.bf16.msra.mxu0 0
    %1010 = vmatpush.bf16.msra.mxu0 %v995
    %1011 = vmatmul.bf16.gmra.mxu0 %v992
    %v1012 = vpop.f32.mrf.mxu0
    %v1013 = vadd.f32 0.0, %v1012
    %v1014 = vpop.f32.mrf.mxu0
    %1015 = vdwg.mxu0
    %1016 = vmatpush.bf16.msra.mxu0 0
    %1017 = vmatpush.bf16.msra.mxu0 0
    %1018 = vmatpush.bf16.msra.mxu0 0
    %1019 = vmatpush.bf16.msra.mxu0 0
    %1020 = vmatpush.bf16.msra.mxu0 0
    %1021 = vmatpush.bf16.msra.mxu0 0
    %1022 = vmatpush.bf16.msra.mxu0 0
    %1023 = vmatpush.bf16.msra.mxu0 %v998
    %1024 = vmatmul.bf16.gmra.mxu0 %v992
    %v1025 = vpop.f32.mrf.mxu0
    %v1026 = vadd.f32 0.0, %v1025
    %v1027 = vpop.f32.mrf.mxu0
    %1028 = vdwg.mxu0
    %1029 = vmatpush.bf16.msra.mxu0 0
    %1030 = vmatpush.bf16.msra.mxu0 0
    %1031 = vmatpush.bf16.msra.mxu0 0
    %1032 = vmatpush.bf16.msra.mxu0 0
    %1033 = vmatpush.bf16.msra.mxu0 0
    %1034 = vmatpush.bf16.msra.mxu0 0
    %1035 = vmatpush.bf16.msra.mxu0 0
    %1036 = vmatpush.bf16.msra.mxu0 %v1001
    %1037 = vmatmul.bf16.gmra.mxu0 %v992
    %v1038 = vpop.f32.mrf.mxu0
    %v1039 = vadd.f32 0.0, %v1038
    %v1040 = vpop.f32.mrf.mxu0
    %1041 = vdwg.mxu0
    %v1042 = vadd.f32 %v968, %v1013
    %v1043 = vadd.f32 %v969, %v1026
    %v1044 = vadd.f32 %v970, %v1039
    %1045 = vst [vmem:[#allocation1] ss:$4 sm:$0xff] %v41
    %v1046 = vld.sshfl [vmem:[#allocation1] sm:$0xff pattern:$0x73625140]
    %v1048 = vld.sshfl [vmem:[#allocation1 + $0x8] sm:$0xff pattern:$0x73625140]
    %v1050 = vld.sshfl [vmem:[#allocation1 + $0x10] sm:$0xff pattern:$0x73625140]
    %v1052 = vld.sshfl [vmem:[#allocation1 + $0x18] sm:$0xff pattern:$0x73625140]
    %1054 = vrot.lane.b32.xlu0 %v1046, 91
    %v1055 = vpop.permute.xlu0 %1054
    %1056 = vrot.lane.b32.xlu0 %v1048, 91
    %v1057 = vpop.permute.xlu0 %1056
    %1058 = vrot.lane.b32.xlu0 %v1050, 91
    %v1059 = vpop.permute.xlu0 %1058
    %1060 = vrot.lane.b32.xlu0 %v1052, 91
    %v1061 = vpop.permute.xlu0 %1060
    %vm1062 = vcmask 744448
    %v1063 = vsel %vm1062, %v1055, %v1057
    %v1064 = vsel %vm1062, %v1057, %v1059
    %v1065 = vsel %vm1062, %v1059, %v1061
    %v1067 = vsel %vm48, %v29, 0
    %v1070 = vsel %vm52, %v1063, 0
    %v1073 = vsel %vm52, %v1064, 0
    %v1076 = vsel %vm52, %v1065, 0
    %1078 = vmatpush.bf16.msra.mxu0 0
    %1079 = vmatpush.bf16.msra.mxu0 0
    %1080 = vmatpush.bf16.msra.mxu0 0
    %1081 = vmatpush.bf16.msra.mxu0 0
    %1082 = vmatpush.bf16.msra.mxu0 0
    %1083 = vmatpush.bf16.msra.mxu0 0
    %1084 = vmatpush.bf16.msra.mxu0 0
    %1085 = vmatpush.bf16.msra.mxu0 %v1070
    %1086 = vmatmul.bf16.gmra.mxu0 %v1067
    %v1087 = vpop.f32.mrf.mxu0
    %v1088 = vadd.f32 0.0, %v1087
    %v1089 = vpop.f32.mrf.mxu0
    %1090 = vdwg.mxu0
    %1091 = vmatpush.bf16.msra.mxu0 0
    %1092 = vmatpush.bf16.msra.mxu0 0
    %1093 = vmatpush.bf16.msra.mxu0 0
    %1094 = vmatpush.bf16.msra.mxu0 0
    %1095 = vmatpush.bf16.msra.mxu0 0
    %1096 = vmatpush.bf16.msra.mxu0 0
    %1097 = vmatpush.bf16.msra.mxu0 0
    %1098 = vmatpush.bf16.msra.mxu0 %v1073
    %1099 = vmatmul.bf16.gmra.mxu0 %v1067
    %v1100 = vpop.f32.mrf.mxu0
    %v1101 = vadd.f32 0.0, %v1100
    %v1102 = vpop.f32.mrf.mxu0
    %1103 = vdwg.mxu0
    %1104 = vmatpush.bf16.msra.mxu0 0
    %1105 = vmatpush.bf16.msra.mxu0 0
    %1106 = vmatpush.bf16.msra.mxu0 0
    %1107 = vmatpush.bf16.msra.mxu0 0
    %1108 = vmatpush.bf16.msra.mxu0 0
    %1109 = vmatpush.bf16.msra.mxu0 0
    %1110 = vmatpush.bf16.msra.mxu0 0
    %1111 = vmatpush.bf16.msra.mxu0 %v1076
    %1112 = vmatmul.bf16.gmra.mxu0 %v1067
    %v1113 = vpop.f32.mrf.mxu0
    %v1114 = vadd.f32 0.0, %v1113
    %v1115 = vpop.f32.mrf.mxu0
    %1116 = vdwg.mxu0
    %v1117 = vadd.f32 %v1042, %v1088
    %v1118 = vadd.f32 %v1043, %v1101
    %v1119 = vadd.f32 %v1044, %v1114
    %1120 = vst [vmem:[#allocation1] ss:$4 sm:$0xff] %v42
    %v1121 = vld.sshfl [vmem:[#allocation1] sm:$0xff pattern:$0x73625140]
    %v1123 = vld.sshfl [vmem:[#allocation1 + $0x8] sm:$0xff pattern:$0x73625140]
    %v1125 = vld.sshfl [vmem:[#allocation1 + $0x10] sm:$0xff pattern:$0x73625140]
    %v1127 = vld.sshfl [vmem:[#allocation1 + $0x18] sm:$0xff pattern:$0x73625140]
    %1129 = vrot.lane.b32.xlu0 %v1121, 91
    %v1130 = vpop.permute.xlu0 %1129
    %1131 = vrot.lane.b32.xlu0 %v1123, 91
    %v1132 = vpop.permute.xlu0 %1131
    %1133 = vrot.lane.b32.xlu0 %v1125, 91
    %v1134 = vpop.permute.xlu0 %1133
    %1135 = vrot.lane.b32.xlu0 %v1127, 91
    %v1136 = vpop.permute.xlu0 %1135
    %v1137 = vsel %vm1062, %v1130, %v1132
    %v1138 = vsel %vm1062, %v1132, %v1134
    %v1139 = vsel %vm1062, %v1134, %v1136
    %v1141 = vsel %vm48, %v38, 0
    %v1144 = vsel %vm52, %v1137, 0
    %v1147 = vsel %vm52, %v1138, 0
    %v1150 = vsel %vm52, %v1139, 0
    %1152 = vmatpush.bf16.msra.mxu0 0
    %1153 = vmatpush.bf16.msra.mxu0 0
    %1154 = vmatpush.bf16.msra.mxu0 0
    %1155 = vmatpush.bf16.msra.mxu0 0
    %1156 = vmatpush.bf16.msra.mxu0 0
    %1157 = vmatpush.bf16.msra.mxu0 0
    %1158 = vmatpush.bf16.msra.mxu0 0
    %1159 = vmatpush.bf16.msra.mxu0 %v1144
    %1160 = vmatmul.bf16.gmra.mxu0 %v1141
    %v1161 = vpop.f32.mrf.mxu0
    %v1162 = vadd.f32 0.0, %v1161
    %v1163 = vpop.f32.mrf.mxu0
    %1164 = vdwg.mxu0
    %1165 = vmatpush.bf16.msra.mxu0 0
    %1166 = vmatpush.bf16.msra.mxu0 0
    %1167 = vmatpush.bf16.msra.mxu0 0
    %1168 = vmatpush.bf16.msra.mxu0 0
    %1169 = vmatpush.bf16.msra.mxu0 0
    %1170 = vmatpush.bf16.msra.mxu0 0
    %1171 = vmatpush.bf16.msra.mxu0 0
    %1172 = vmatpush.bf16.msra.mxu0 %v1147
    %1173 = vmatmul.bf16.gmra.mxu0 %v1141
    %v1174 = vpop.f32.mrf.mxu0
    %v1175 = vadd.f32 0.0, %v1174
    %v1176 = vpop.f32.mrf.mxu0
    %1177 = vdwg.mxu0
    %1178 = vmatpush.bf16.msra.mxu0 0
    %1179 = vmatpush.bf16.msra.mxu0 0
    %1180 = vmatpush.bf16.msra.mxu0 0
    %1181 = vmatpush.bf16.msra.mxu0 0
    %1182 = vmatpush.bf16.msra.mxu0 0
    %1183 = vmatpush.bf16.msra.mxu0 0
    %1184 = vmatpush.bf16.msra.mxu0 0
    %1185 = vmatpush.bf16.msra.mxu0 %v1150
    %1186 = vmatmul.bf16.gmra.mxu0 %v1141
    %v1187 = vpop.f32.mrf.mxu0
    %v1188 = vadd.f32 0.0, %v1187
    %v1189 = vpop.f32.mrf.mxu0
    %1190 = vdwg.mxu0
    %v1191 = vadd.f32 %v1117, %v1162
    %v1192 = vadd.f32 %v1118, %v1175
    %v1193 = vadd.f32 %v1119, %v1188
    %1194 = vst [vmem:[#allocation1] ss:$4 sm:$0xff] %v41
    %v1195 = vld.sshfl [vmem:[#allocation1] sm:$0xff pattern:$0x73625140]
    %v1197 = vld.sshfl [vmem:[#allocation1 + $0x8] sm:$0xff pattern:$0x73625140]
    %v1199 = vld.sshfl [vmem:[#allocation1 + $0x10] sm:$0xff pattern:$0x73625140]
    %v1201 = vld.sshfl [vmem:[#allocation1 + $0x18] sm:$0xff pattern:$0x73625140]
    %1203 = vrot.lane.b32.xlu0 %v1195, 90
    %v1204 = vpop.permute.xlu0 %1203
    %1205 = vrot.lane.b32.xlu0 %v1197, 90
    %v1206 = vpop.permute.xlu0 %1205
    %1207 = vrot.lane.b32.xlu0 %v1199, 90
    %v1208 = vpop.permute.xlu0 %1207
    %1209 = vrot.lane.b32.xlu0 %v1201, 90
    %v1210 = vpop.permute.xlu0 %1209
    %vm1211 = vcmask 736256
    %v1212 = vsel %vm1211, %v1204, %v1206
    %v1213 = vsel %vm1211, %v1206, %v1208
    %v1214 = vsel %vm1211, %v1208, %v1210
    %v1216 = vsel %vm48, %v30, 0
    %v1219 = vsel %vm52, %v1212, 0
    %v1222 = vsel %vm52, %v1213, 0
    %v1225 = vsel %vm52, %v1214, 0
    %1227 = vmatpush.bf16.msra.mxu0 0
    %1228 = vmatpush.bf16.msra.mxu0 0
    %1229 = vmatpush.bf16.msra.mxu0 0
    %1230 = vmatpush.bf16.msra.mxu0 0
    %1231 = vmatpush.bf16.msra.mxu0 0
    %1232 = vmatpush.bf16.msra.mxu0 0
    %1233 = vmatpush.bf16.msra.mxu0 0
    %1234 = vmatpush.bf16.msra.mxu0 %v1219
    %1235 = vmatmul.bf16.gmra.mxu0 %v1216
    %v1236 = vpop.f32.mrf.mxu0
    %v1237 = vadd.f32 0.0, %v1236
    %v1238 = vpop.f32.mrf.mxu0
    %1239 = vdwg.mxu0
    %1240 = vmatpush.bf16.msra.mxu0 0
    %1241 = vmatpush.bf16.msra.mxu0 0
    %1242 = vmatpush.bf16.msra.mxu0 0
    %1243 = vmatpush.bf16.msra.mxu0 0
    %1244 = vmatpush.bf16.msra.mxu0 0
    %1245 = vmatpush.bf16.msra.mxu0 0
    %1246 = vmatpush.bf16.msra.mxu0 0
    %1247 = vmatpush.bf16.msra.mxu0 %v1222
    %1248 = vmatmul.bf16.gmra.mxu0 %v1216
    %v1249 = vpop.f32.mrf.mxu0
    %v1250 = vadd.f32 0.0, %v1249
    %v1251 = vpop.f32.mrf.mxu0
    %1252 = vdwg.mxu0
    %1253 = vmatpush.bf16.msra.mxu0 0
    %1254 = vmatpush.bf16.msra.mxu0 0
    %1255 = vmatpush.bf16.msra.mxu0 0
    %1256 = vmatpush.bf16.msra.mxu0 0
    %1257 = vmatpush.bf16.msra.mxu0 0
    %1258 = vmatpush.bf16.msra.mxu0 0
    %1259 = vmatpush.bf16.msra.mxu0 0
    %1260 = vmatpush.bf16.msra.mxu0 %v1225
    %1261 = vmatmul.bf16.gmra.mxu0 %v1216
    %v1262 = vpop.f32.mrf.mxu0
    %v1263 = vadd.f32 0.0, %v1262
    %v1264 = vpop.f32.mrf.mxu0
    %1265 = vdwg.mxu0
    %v1266 = vadd.f32 %v1191, %v1237
    %v1267 = vadd.f32 %v1192, %v1250
    %v1268 = vadd.f32 %v1193, %v1263
    %1269 = vst [vmem:[#allocation1] ss:$4 sm:$0xff] %v42
    %v1270 = vld.sshfl [vmem:[#allocation1] sm:$0xff pattern:$0x73625140]
    %v1272 = vld.sshfl [vmem:[#allocation1 + $0x8] sm:$0xff pattern:$0x73625140]
    %v1274 = vld.sshfl [vmem:[#allocation1 + $0x10] sm:$0xff pattern:$0x73625140]
    %v1276 = vld.sshfl [vmem:[#allocation1 + $0x18] sm:$0xff pattern:$0x73625140]
    %1278 = vrot.lane.b32.xlu0 %v1270, 90
    %v1279 = vpop.permute.xlu0 %1278
    %1280 = vrot.lane.b32.xlu0 %v1272, 90
    %v1281 = vpop.permute.xlu0 %1280
    %1282 = vrot.lane.b32.xlu0 %v1274, 90
    %v1283 = vpop.permute.xlu0 %1282
    %1284 = vrot.lane.b32.xlu0 %v1276, 90
    %v1285 = vpop.permute.xlu0 %1284
    %v1286 = vsel %vm1211, %v1279, %v1281
    %v1287 = vsel %vm1211, %v1281, %v1283
    %v1288 = vsel %vm1211, %v1283, %v1285
    %v1290 = vsel %vm48, %v39, 0
    %v1293 = vsel %vm52, %v1286, 0
    %v1296 = vsel %vm52, %v1287, 0
    %v1299 = vsel %vm52, %v1288, 0
    %1301 = vmatpush.bf16.msra.mxu0 0
    %1302 = vmatpush.bf16.msra.mxu0 0
    %1303 = vmatpush.bf16.msra.mxu0 0
    %1304 = vmatpush.bf16.msra.mxu0 0
    %1305 = vmatpush.bf16.msra.mxu0 0
    %1306 = vmatpush.bf16.msra.mxu0 0
    %1307 = vmatpush.bf16.msra.mxu0 0
    %1308 = vmatpush.bf16.msra.mxu0 %v1293
    %1309 = vmatmul.bf16.gmra.mxu0 %v1290
    %v1310 = vpop.f32.mrf.mxu0
    %v1311 = vadd.f32 0.0, %v1310
    %v1312 = vpop.f32.mrf.mxu0
    %1313 = vdwg.mxu0
    %1314 = vmatpush.bf16.msra.mxu0 0
    %1315 = vmatpush.bf16.msra.mxu0 0
    %1316 = vmatpush.bf16.msra.mxu0 0
    %1317 = vmatpush.bf16.msra.mxu0 0
    %1318 = vmatpush.bf16.msra.mxu0 0
    %1319 = vmatpush.bf16.msra.mxu0 0
    %1320 = vmatpush.bf16.msra.mxu0 0
    %1321 = vmatpush.bf16.msra.mxu0 %v1296
    %1322 = vmatmul.bf16.gmra.mxu0 %v1290
    %v1323 = vpop.f32.mrf.mxu0
    %v1324 = vadd.f32 0.0, %v1323
    %v1325 = vpop.f32.mrf.mxu0
    %1326 = vdwg.mxu0
    %1327 = vmatpush.bf16.msra.mxu0 0
    %1328 = vmatpush.bf16.msra.mxu0 0
    %1329 = vmatpush.bf16.msra.mxu0 0
    %1330 = vmatpush.bf16.msra.mxu0 0
    %1331 = vmatpush.bf16.msra.mxu0 0
    %1332 = vmatpush.bf16.msra.mxu0 0
    %1333 = vmatpush.bf16.msra.mxu0 0
    %1334 = vmatpush.bf16.msra.mxu0 %v1299
    %1335 = vmatmul.bf16.gmra.mxu0 %v1290
    %v1336 = vpop.f32.mrf.mxu0
    %v1337 = vadd.f32 0.0, %v1336
    %v1338 = vpop.f32.mrf.mxu0
    %1339 = vdwg.mxu0
    %v1340 = vadd.f32 %v1266, %v1311
    %v1341 = vadd.f32 %v1267, %v1324
    %v1342 = vadd.f32 %v1268, %v1337
    %1344 = vset.pattern.permute.xlu0 0
    %1345 = vperm.xlu0 %1344, %v40
    %v1346 = vpop.permute.xlu0 %1345
    %v1348 = vadd.f32 %v1340, %v1346
    %v1349 = vadd.f32 %v1341, %v1346
    %v1350 = vadd.f32 %v1342, %v1346
    %1351 = vst [vmem:[#allocation2] sm:$0xff] %v1348
    %1352 = vst [vmem:[#allocation2 + $0x8] sm:$0xff] %v1349
    %1353 = vst [vmem:[#allocation2 + $0x10] sm:$0xff] %v1350
    %s1354 = scalar_lea.vmem %s0, 8
    %v1355 = vld [vmem:[%s1354] sm:$0xff]
    %s1356 = scalar_lea.vmem %s1, 8
    %v1357 = vld [vmem:[%s1356] sm:$0xff]
    %1359 = vst [vmem:[#allocation1] ss:$4 sm:$0xff] %v1357
    %v1360 = vld.sshfl [vmem:[#allocation1] sm:$0xff pattern:$0x73625140]
    %v1361 = vld.sshfl [vmem:[#allocation1 + $0x8] sm:$0xff pattern:$0x73625140]
    %v1362 = vld.sshfl [vmem:[#allocation1 + $0x10] sm:$0xff pattern:$0x73625140]
    %v1363 = vsel %vm52, %v1360, 0
    %v1365 = vsel %vm52, %v1361, 0
    %v1367 = vsel %vm52, %v1362, 0
    %1369 = vmatpush.bf16.msra.mxu0 0
    %1370 = vmatpush.bf16.msra.mxu0 0
    %1371 = vmatpush.bf16.msra.mxu0 0
    %1372 = vmatpush.bf16.msra.mxu0 0
    %1373 = vmatpush.bf16.msra.mxu0 0
    %1374 = vmatpush.bf16.msra.mxu0 0
    %1375 = vmatpush.bf16.msra.mxu0 0
    %1376 = vmatpush.bf16.msra.mxu0 %v1363
    %1377 = vmatmul.bf16.gmra.mxu0 %v50
    %v1378 = vpop.f32.mrf.mxu0
    %v1379 = vadd.f32 0.0, %v1378
    %v1380 = vpop.f32.mrf.mxu0
    %1381 = vdwg.mxu0
    %1382 = vmatpush.bf16.msra.mxu0 0
    %1383 = vmatpush.bf16.msra.mxu0 0
    %1384 = vmatpush.bf16.msra.mxu0 0
    %1385 = vmatpush.bf16.msra.mxu0 0
    %1386 = vmatpush.bf16.msra.mxu0 0
    %1387 = vmatpush.bf16.msra.mxu0 0
    %1388 = vmatpush.bf16.msra.mxu0 0
    %1389 = vmatpush.bf16.msra.mxu0 %v1365
    %1390 = vmatmul.bf16.gmra.mxu0 %v50
    %v1391 = vpop.f32.mrf.mxu0
    %v1392 = vadd.f32 0.0, %v1391
    %v1393 = vpop.f32.mrf.mxu0
    %1394 = vdwg.mxu0
    %1395 = vmatpush.bf16.msra.mxu0 0
    %1396 = vmatpush.bf16.msra.mxu0 0
    %1397 = vmatpush.bf16.msra.mxu0 0
    %1398 = vmatpush.bf16.msra.mxu0 0
    %1399 = vmatpush.bf16.msra.mxu0 0
    %1400 = vmatpush.bf16.msra.mxu0 0
    %1401 = vmatpush.bf16.msra.mxu0 0
    %1402 = vmatpush.bf16.msra.mxu0 %v1367
    %1403 = vmatmul.bf16.gmra.mxu0 %v50
    %v1404 = vpop.f32.mrf.mxu0
    %v1405 = vadd.f32 0.0, %v1404
    %v1406 = vpop.f32.mrf.mxu0
    %1407 = vdwg.mxu0
    %1409 = vst [vmem:[#allocation1] ss:$4 sm:$0xff] %v1355
    %v1410 = vld.sshfl [vmem:[#allocation1] sm:$0xff pattern:$0x73625140]
    %v1411 = vld.sshfl [vmem:[#allocation1 + $0x8] sm:$0xff pattern:$0x73625140]
    %v1412 = vld.sshfl [vmem:[#allocation1 + $0x10] sm:$0xff pattern:$0x73625140]
    %v1413 = vsel %vm52, %v1410, 0
    %v1415 = vsel %vm52, %v1411, 0
    %v1417 = vsel %vm52, %v1412, 0
    %1419 = vmatpush.bf16.msra.mxu0 0
    %1420 = vmatpush.bf16.msra.mxu0 0
    %1421 = vmatpush.bf16.msra.mxu0 0
    %1422 = vmatpush.bf16.msra.mxu0 0
    %1423 = vmatpush.bf16.msra.mxu0 0
    %1424 = vmatpush.bf16.msra.mxu0 0
    %1425 = vmatpush.bf16.msra.mxu0 0
    %1426 = vmatpush.bf16.msra.mxu0 %v1413
    %1427 = vmatmul.bf16.gmra.mxu0 %v104
    %v1428 = vpop.f32.mrf.mxu0
    %v1429 = vadd.f32 %v1379, %v1428
    %v1430 = vpop.f32.mrf.mxu0
    %1431 = vdwg.mxu0
    %1432 = vmatpush.bf16.msra.mxu0 0
    %1433 = vmatpush.bf16.msra.mxu0 0
    %1434 = vmatpush.bf16.msra.mxu0 0
    %1435 = vmatpush.bf16.msra.mxu0 0
    %1436 = vmatpush.bf16.msra.mxu0 0
    %1437 = vmatpush.bf16.msra.mxu0 0
    %1438 = vmatpush.bf16.msra.mxu0 0
    %1439 = vmatpush.bf16.msra.mxu0 %v1415
    %1440 = vmatmul.bf16.gmra.mxu0 %v104
    %v1441 = vpop.f32.mrf.mxu0
    %v1442 = vadd.f32 %v1392, %v1441
    %v1443 = vpop.f32.mrf.mxu0
    %1444 = vdwg.mxu0
    %1445 = vmatpush.bf16.msra.mxu0 0
    %1446 = vmatpush.bf16.msra.mxu0 0
    %1447 = vmatpush.bf16.msra.mxu0 0
    %1448 = vmatpush.bf16.msra.mxu0 0
    %1449 = vmatpush.bf16.msra.mxu0 0
    %1450 = vmatpush.bf16.msra.mxu0 0
    %1451 = vmatpush.bf16.msra.mxu0 0
    %1452 = vmatpush.bf16.msra.mxu0 %v1417
    %1453 = vmatmul.bf16.gmra.mxu0 %v104
    %v1454 = vpop.f32.mrf.mxu0
    %v1455 = vadd.f32 %v1405, %v1454
    %v1456 = vpop.f32.mrf.mxu0
    %1457 = vdwg.mxu0
    %1458 = vst [vmem:[#allocation1] ss:$4 sm:$0xff] %v1355
    %v1459 = vld.sshfl [vmem:[#allocation1] sm:$0xff pattern:$0x73625140]
    %v1461 = vld.sshfl [vmem:[#allocation1 + $0x8] sm:$0xff pattern:$0x73625140]
    %v1463 = vld.sshfl [vmem:[#allocation1 + $0x10] sm:$0xff pattern:$0x73625140]
    %v1465 = vld.sshfl [vmem:[#allocation1 + $0x18] sm:$0xff pattern:$0x73625140]
    %1467 = vrot.lane.b32.xlu0 %v1459, 127
    %v1468 = vpop.permute.xlu0 %1467
    %1469 = vrot.lane.b32.xlu0 %v1461, 127
    %v1470 = vpop.permute.xlu0 %1469
    %1471 = vrot.lane.b32.xlu0 %v1463, 127
    %v1472 = vpop.permute.xlu0 %1471
    %1473 = vrot.lane.b32.xlu0 %v1465, 127
    %v1474 = vpop.permute.xlu0 %1473
    %v1475 = vsel %vm168, %v1468, %v1470
    %v1476 = vsel %vm168, %v1470, %v1472
    %v1477 = vsel %vm168, %v1472, %v1474
    %v1479 = vsel %vm52, %v1475, 0
    %v1482 = vsel %vm52, %v1476, 0
    %v1485 = vsel %vm52, %v1477, 0
    %1487 = vmatpush.bf16.msra.mxu0 0
    %1488 = vmatpush.bf16.msra.mxu0 0
    %1489 = vmatpush.bf16.msra.mxu0 0
    %1490 = vmatpush.bf16.msra.mxu0 0
    %1491 = vmatpush.bf16.msra.mxu0 0
    %1492 = vmatpush.bf16.msra.mxu0 0
    %1493 = vmatpush.bf16.msra.mxu0 0
    %1494 = vmatpush.bf16.msra.mxu0 %v1479
    %1495 = vmatmul.bf16.gmra.mxu0 %v173
    %v1496 = vpop.f32.mrf.mxu0
    %v1497 = vadd.f32 0.0, %v1496
    %v1498 = vpop.f32.mrf.mxu0
    %1499 = vdwg.mxu0
    %1500 = vmatpush.bf16.msra.mxu0 0
    %1501 = vmatpush.bf16.msra.mxu0 0
    %1502 = vmatpush.bf16.msra.mxu0 0
    %1503 = vmatpush.bf16.msra.mxu0 0
    %1504 = vmatpush.bf16.msra.mxu0 0
    %1505 = vmatpush.bf16.msra.mxu0 0
    %1506 = vmatpush.bf16.msra.mxu0 0
    %1507 = vmatpush.bf16.msra.mxu0 %v1482
    %1508 = vmatmul.bf16.gmra.mxu0 %v173
    %v1509 = vpop.f32.mrf.mxu0
    %v1510 = vadd.f32 0.0, %v1509
    %v1511 = vpop.f32.mrf.mxu0
    %1512 = vdwg.mxu0
    %1513 = vmatpush.bf16.msra.mxu0 0
    %1514 = vmatpush.bf16.msra.mxu0 0
    %1515 = vmatpush.bf16.msra.mxu0 0
    %1516 = vmatpush.bf16.msra.mxu0 0
    %1517 = vmatpush.bf16.msra.mxu0 0
    %1518 = vmatpush.bf16.msra.mxu0 0
    %1519 = vmatpush.bf16.msra.mxu0 0
    %1520 = vmatpush.bf16.msra.mxu0 %v1485
    %1521 = vmatmul.bf16.gmra.mxu0 %v173
    %v1522 = vpop.f32.mrf.mxu0
    %v1523 = vadd.f32 0.0, %v1522
    %v1524 = vpop.f32.mrf.mxu0
    %1525 = vdwg.mxu0
    %v1526 = vadd.f32 %v1429, %v1497
    %v1527 = vadd.f32 %v1442, %v1510
    %v1528 = vadd.f32 %v1455, %v1523
    %1529 = vst [vmem:[#allocation1] ss:$4 sm:$0xff] %v1357
    %v1530 = vld.sshfl [vmem:[#allocation1] sm:$0xff pattern:$0x73625140]
    %v1532 = vld.sshfl [vmem:[#allocation1 + $0x8] sm:$0xff pattern:$0x73625140]
    %v1534 = vld.sshfl [vmem:[#allocation1 + $0x10] sm:$0xff pattern:$0x73625140]
    %v1536 = vld.sshfl [vmem:[#allocation1 + $0x18] sm:$0xff pattern:$0x73625140]
    %1538 = vrot.lane.b32.xlu0 %v1530, 127
    %v1539 = vpop.permute.xlu0 %1538
    %1540 = vrot.lane.b32.xlu0 %v1532, 127
    %v1541 = vpop.permute.xlu0 %1540
    %1542 = vrot.lane.b32.xlu0 %v1534, 127
    %v1543 = vpop.permute.xlu0 %1542
    %1544 = vrot.lane.b32.xlu0 %v1536, 127
    %v1545 = vpop.permute.xlu0 %1544
    %v1546 = vsel %vm168, %v1539, %v1541
    %v1547 = vsel %vm168, %v1541, %v1543
    %v1548 = vsel %vm168, %v1543, %v1545
    %v1550 = vsel %vm52, %v1546, 0
    %v1553 = vsel %vm52, %v1547, 0
    %v1556 = vsel %vm52, %v1548, 0
    %1558 = vmatpush.bf16.msra.mxu0 0
    %1559 = vmatpush.bf16.msra.mxu0 0
    %1560 = vmatpush.bf16.msra.mxu0 0
    %1561 = vmatpush.bf16.msra.mxu0 0
    %1562 = vmatpush.bf16.msra.mxu0 0
    %1563 = vmatpush.bf16.msra.mxu0 0
    %1564 = vmatpush.bf16.msra.mxu0 0
    %1565 = vmatpush.bf16.msra.mxu0 %v1550
    %1566 = vmatmul.bf16.gmra.mxu0 %v247
    %v1567 = vpop.f32.mrf.mxu0
    %v1568 = vadd.f32 0.0, %v1567
    %v1569 = vpop.f32.mrf.mxu0
    %1570 = vdwg.mxu0
    %1571 = vmatpush.bf16.msra.mxu0 0
    %1572 = vmatpush.bf16.msra.mxu0 0
    %1573 = vmatpush.bf16.msra.mxu0 0
    %1574 = vmatpush.bf16.msra.mxu0 0
    %1575 = vmatpush.bf16.msra.mxu0 0
    %1576 = vmatpush.bf16.msra.mxu0 0
    %1577 = vmatpush.bf16.msra.mxu0 0
    %1578 = vmatpush.bf16.msra.mxu0 %v1553
    %1579 = vmatmul.bf16.gmra.mxu0 %v247
    %v1580 = vpop.f32.mrf.mxu0
    %v1581 = vadd.f32 0.0, %v1580
    %v1582 = vpop.f32.mrf.mxu0
    %1583 = vdwg.mxu0
    %1584 = vmatpush.bf16.msra.mxu0 0
    %1585 = vmatpush.bf16.msra.mxu0 0
    %1586 = vmatpush.bf16.msra.mxu0 0
    %1587 = vmatpush.bf16.msra.mxu0 0
    %1588 = vmatpush.bf16.msra.mxu0 0
    %1589 = vmatpush.bf16.msra.mxu0 0
    %1590 = vmatpush.bf16.msra.mxu0 0
    %1591 = vmatpush.bf16.msra.mxu0 %v1556
    %1592 = vmatmul.bf16.gmra.mxu0 %v247
    %v1593 = vpop.f32.mrf.mxu0
    %v1594 = vadd.f32 0.0, %v1593
    %v1595 = vpop.f32.mrf.mxu0
    %1596 = vdwg.mxu0
    %v1597 = vadd.f32 %v1526, %v1568
    %v1598 = vadd.f32 %v1527, %v1581
    %v1599 = vadd.f32 %v1528, %v1594
    %1600 = vst [vmem:[#allocation1] ss:$4 sm:$0xff] %v1355
    %v1601 = vld.sshfl [vmem:[#allocation1] sm:$0xff pattern:$0x73625140]
    %v1603 = vld.sshfl [vmem:[#allocation1 + $0x8] sm:$0xff pattern:$0x73625140]
    %v1605 = vld.sshfl [vmem:[#allocation1 + $0x10] sm:$0xff pattern:$0x73625140]
    %v1607 = vld.sshfl [vmem:[#allocation1 + $0x18] sm:$0xff pattern:$0x73625140]
    %1609 = vrot.lane.b32.xlu0 %v1601, 126
    %v1610 = vpop.permute.xlu0 %1609
    %1611 = vrot.lane.b32.xlu0 %v1603, 126
    %v1612 = vpop.permute.xlu0 %1611
    %1613 = vrot.lane.b32.xlu0 %v1605, 126
    %v1614 = vpop.permute.xlu0 %1613
    %1615 = vrot.lane.b32.xlu0 %v1607, 126
    %v1616 = vpop.permute.xlu0 %1615
    %v1617 = vsel %vm317, %v1610, %v1612
    %v1618 = vsel %vm317, %v1612, %v1614
    %v1619 = vsel %vm317, %v1614, %v1616
    %v1621 = vsel %vm52, %v1617, 0
    %v1624 = vsel %vm52, %v1618, 0
    %v1627 = vsel %vm52, %v1619, 0
    %1629 = vmatpush.bf16.msra.mxu0 0
    %1630 = vmatpush.bf16.msra.mxu0 0
    %1631 = vmatpush.bf16.msra.mxu0 0
    %1632 = vmatpush.bf16.msra.mxu0 0
    %1633 = vmatpush.bf16.msra.mxu0 0
    %1634 = vmatpush.bf16.msra.mxu0 0
    %1635 = vmatpush.bf16.msra.mxu0 0
    %1636 = vmatpush.bf16.msra.mxu0 %v1621
    %1637 = vmatmul.bf16.gmra.mxu0 %v322
    %v1638 = vpop.f32.mrf.mxu0
    %v1639 = vadd.f32 0.0, %v1638
    %v1640 = vpop.f32.mrf.mxu0
    %1641 = vdwg.mxu0
    %1642 = vmatpush.bf16.msra.mxu0 0
    %1643 = vmatpush.bf16.msra.mxu0 0
    %1644 = vmatpush.bf16.msra.mxu0 0
    %1645 = vmatpush.bf16.msra.mxu0 0
    %1646 = vmatpush.bf16.msra.mxu0 0
    %1647 = vmatpush.bf16.msra.mxu0 0
    %1648 = vmatpush.bf16.msra.mxu0 0
    %1649 = vmatpush.bf16.msra.mxu0 %v1624
    %1650 = vmatmul.bf16.gmra.mxu0 %v322
    %v1651 = vpop.f32.mrf.mxu0
    %v1652 = vadd.f32 0.0, %v1651
    %v1653 = vpop.f32.mrf.mxu0
    %1654 = vdwg.mxu0
    %1655 = vmatpush.bf16.msra.mxu0 0
    %1656 = vmatpush.bf16.msra.mxu0 0
    %1657 = vmatpush.bf16.msra.mxu0 0
    %1658 = vmatpush.bf16.msra.mxu0 0
    %1659 = vmatpush.bf16.msra.mxu0 0
    %1660 = vmatpush.bf16.msra.mxu0 0
    %1661 = vmatpush.bf16.msra.mxu0 0
    %1662 = vmatpush.bf16.msra.mxu0 %v1627
    %1663 = vmatmul.bf16.gmra.mxu0 %v322
    %v1664 = vpop.f32.mrf.mxu0
    %v1665 = vadd.f32 0.0, %v1664
    %v1666 = vpop.f32.mrf.mxu0
    %1667 = vdwg.mxu0
    %v1668 = vadd.f32 %v1597, %v1639
    %v1669 = vadd.f32 %v1598, %v1652
    %v1670 = vadd.f32 %v1599, %v1665
    %1671 = vst [vmem:[#allocation1] ss:$4 sm:$0xff] %v1357
    %v1672 = vld.sshfl [vmem:[#allocation1] sm:$0xff pattern:$0x73625140]
    %v1674 = vld.sshfl [vmem:[#allocation1 + $0x8] sm:$0xff pattern:$0x73625140]
    %v1676 = vld.sshfl [vmem:[#allocation1 + $0x10] sm:$0xff pattern:$0x73625140]
    %v1678 = vld.sshfl [vmem:[#allocation1 + $0x18] sm:$0xff pattern:$0x73625140]
    %1680 = vrot.lane.b32.xlu0 %v1672, 126
    %v1681 = vpop.permute.xlu0 %1680
    %1682 = vrot.lane.b32.xlu0 %v1674, 126
    %v1683 = vpop.permute.xlu0 %1682
    %1684 = vrot.lane.b32.xlu0 %v1676, 126
    %v1685 = vpop.permute.xlu0 %1684
    %1686 = vrot.lane.b32.xlu0 %v1678, 126
    %v1687 = vpop.permute.xlu0 %1686
    %v1688 = vsel %vm317, %v1681, %v1683
    %v1689 = vsel %vm317, %v1683, %v1685
    %v1690 = vsel %vm317, %v1685, %v1687
    %v1692 = vsel %vm52, %v1688, 0
    %v1695 = vsel %vm52, %v1689, 0
    %v1698 = vsel %vm52, %v1690, 0
    %1700 = vmatpush.bf16.msra.mxu0 0
    %1701 = vmatpush.bf16.msra.mxu0 0
    %1702 = vmatpush.bf16.msra.mxu0 0
    %1703 = vmatpush.bf16.msra.mxu0 0
    %1704 = vmatpush.bf16.msra.mxu0 0
    %1705 = vmatpush.bf16.msra.mxu0 0
    %1706 = vmatpush.bf16.msra.mxu0 0
    %1707 = vmatpush.bf16.msra.mxu0 %v1692
    %1708 = vmatmul.bf16.gmra.mxu0 %v396
    %v1709 = vpop.f32.mrf.mxu0
    %v1710 = vadd.f32 0.0, %v1709
    %v1711 = vpop.f32.mrf.mxu0
    %1712 = vdwg.mxu0
    %1713 = vmatpush.bf16.msra.mxu0 0
    %1714 = vmatpush.bf16.msra.mxu0 0
    %1715 = vmatpush.bf16.msra.mxu0 0
    %1716 = vmatpush.bf16.msra.mxu0 0
    %1717 = vmatpush.bf16.msra.mxu0 0
    %1718 = vmatpush.bf16.msra.mxu0 0
    %1719 = vmatpush.bf16.msra.mxu0 0
    %1720 = vmatpush.bf16.msra.mxu0 %v1695
    %1721 = vmatmul.bf16.gmra.mxu0 %v396
    %v1722 = vpop.f32.mrf.mxu0
    %v1723 = vadd.f32 0.0, %v1722
    %v1724 = vpop.f32.mrf.mxu0
    %1725 = vdwg.mxu0
    %1726 = vmatpush.bf16.msra.mxu0 0
    %1727 = vmatpush.bf16.msra.mxu0 0
    %1728 = vmatpush.bf16.msra.mxu0 0
    %1729 = vmatpush.bf16.msra.mxu0 0
    %1730 = vmatpush.bf16.msra.mxu0 0
    %1731 = vmatpush.bf16.msra.mxu0 0
    %1732 = vmatpush.bf16.msra.mxu0 0
    %1733 = vmatpush.bf16.msra.mxu0 %v1698
    %1734 = vmatmul.bf16.gmra.mxu0 %v396
    %v1735 = vpop.f32.mrf.mxu0
    %v1736 = vadd.f32 0.0, %v1735
    %v1737 = vpop.f32.mrf.mxu0
    %1738 = vdwg.mxu0
    %v1739 = vadd.f32 %v1668, %v1710
    %v1740 = vadd.f32 %v1669, %v1723
    %v1741 = vadd.f32 %v1670, %v1736
    %1742 = vst [vmem:[#allocation1] ss:$4 sm:$0xff] %v1355
    %v1743 = vld.sshfl [vmem:[#allocation1] sm:$0xff pattern:$0x73625140]
    %v1745 = vld.sshfl [vmem:[#allocation1 + $0x8] sm:$0xff pattern:$0x73625140]
    %v1747 = vld.sshfl [vmem:[#allocation1 + $0x10] sm:$0xff pattern:$0x73625140]
    %v1749 = vld.sshfl [vmem:[#allocation1 + $0x18] sm:$0xff pattern:$0x73625140]
    %1751 = vrot.lane.b32.xlu0 %v1743, 110
    %v1752 = vpop.permute.xlu0 %1751
    %1753 = vrot.lane.b32.xlu0 %v1745, 110
    %v1754 = vpop.permute.xlu0 %1753
    %1755 = vrot.lane.b32.xlu0 %v1747, 110
    %v1756 = vpop.permute.xlu0 %1755
    %1757 = vrot.lane.b32.xlu0 %v1749, 110
    %v1758 = vpop.permute.xlu0 %1757
    %v1759 = vsel %vm466, %v1752, %v1754
    %v1760 = vsel %vm466, %v1754, %v1756
    %v1761 = vsel %vm466, %v1756, %v1758
    %v1763 = vsel %vm52, %v1759, 0
    %v1766 = vsel %vm52, %v1760, 0
    %v1769 = vsel %vm52, %v1761, 0
    %1771 = vmatpush.bf16.msra.mxu0 0
    %1772 = vmatpush.bf16.msra.mxu0 0
    %1773 = vmatpush.bf16.msra.mxu0 0
    %1774 = vmatpush.bf16.msra.mxu0 0
    %1775 = vmatpush.bf16.msra.mxu0 0
    %1776 = vmatpush.bf16.msra.mxu0 0
    %1777 = vmatpush.bf16.msra.mxu0 0
    %1778 = vmatpush.bf16.msra.mxu0 %v1763
    %1779 = vmatmul.bf16.gmra.mxu0 %v471
    %v1780 = vpop.f32.mrf.mxu0
    %v1781 = vadd.f32 0.0, %v1780
    %v1782 = vpop.f32.mrf.mxu0
    %1783 = vdwg.mxu0
    %1784 = vmatpush.bf16.msra.mxu0 0
    %1785 = vmatpush.bf16.msra.mxu0 0
    %1786 = vmatpush.bf16.msra.mxu0 0
    %1787 = vmatpush.bf16.msra.mxu0 0
    %1788 = vmatpush.bf16.msra.mxu0 0
    %1789 = vmatpush.bf16.msra.mxu0 0
    %1790 = vmatpush.bf16.msra.mxu0 0
    %1791 = vmatpush.bf16.msra.mxu0 %v1766
    %1792 = vmatmul.bf16.gmra.mxu0 %v471
    %v1793 = vpop.f32.mrf.mxu0
    %v1794 = vadd.f32 0.0, %v1793
    %v1795 = vpop.f32.mrf.mxu0
    %1796 = vdwg.mxu0
    %1797 = vmatpush.bf16.msra.mxu0 0
    %1798 = vmatpush.bf16.msra.mxu0 0
    %1799 = vmatpush.bf16.msra.mxu0 0
    %1800 = vmatpush.bf16.msra.mxu0 0
    %1801 = vmatpush.bf16.msra.mxu0 0
    %1802 = vmatpush.bf16.msra.mxu0 0
    %1803 = vmatpush.bf16.msra.mxu0 0
    %1804 = vmatpush.bf16.msra.mxu0 %v1769
    %1805 = vmatmul.bf16.gmra.mxu0 %v471
    %v1806 = vpop.f32.mrf.mxu0
    %v1807 = vadd.f32 0.0, %v1806
    %v1808 = vpop.f32.mrf.mxu0
    %1809 = vdwg.mxu0
    %v1810 = vadd.f32 %v1739, %v1781
    %v1811 = vadd.f32 %v1740, %v1794
    %v1812 = vadd.f32 %v1741, %v1807
    %1813 = vst [vmem:[#allocation1] ss:$4 sm:$0xff] %v1357
    %v1814 = vld.sshfl [vmem:[#allocation1] sm:$0xff pattern:$0x73625140]
    %v1816 = vld.sshfl [vmem:[#allocation1 + $0x8] sm:$0xff pattern:$0x73625140]
    %v1818 = vld.sshfl [vmem:[#allocation1 + $0x10] sm:$0xff pattern:$0x73625140]
    %v1820 = vld.sshfl [vmem:[#allocation1 + $0x18] sm:$0xff pattern:$0x73625140]
    %1822 = vrot.lane.b32.xlu0 %v1814, 110
    %v1823 = vpop.permute.xlu0 %1822
    %1824 = vrot.lane.b32.xlu0 %v1816, 110
    %v1825 = vpop.permute.xlu0 %1824
    %1826 = vrot.lane.b32.xlu0 %v1818, 110
    %v1827 = vpop.permute.xlu0 %1826
    %1828 = vrot.lane.b32.xlu0 %v1820, 110
    %v1829 = vpop.permute.xlu0 %1828
    %v1830 = vsel %vm466, %v1823, %v1825
    %v1831 = vsel %vm466, %v1825, %v1827
    %v1832 = vsel %vm466, %v1827, %v1829
    %v1834 = vsel %vm52, %v1830, 0
    %v1837 = vsel %vm52, %v1831, 0
    %v1840 = vsel %vm52, %v1832, 0
    %1842 = vmatpush.bf16.msra.mxu0 0
    %1843 = vmatpush.bf16.msra.mxu0 0
    %1844 = vmatpush.bf16.msra.mxu0 0
    %1845 = vmatpush.bf16.msra.mxu0 0
    %1846 = vmatpush.bf16.msra.mxu0 0
    %1847 = vmatpush.bf16.msra.mxu0 0
    %1848 = vmatpush.bf16.msra.mxu0 0
    %1849 = vmatpush.bf16.msra.mxu0 %v1834
    %1850 = vmatmul.bf16.gmra.mxu0 %v545
    %v1851 = vpop.f32.mrf.mxu0
    %v1852 = vadd.f32 0.0, %v1851
    %v1853 = vpop.f32.mrf.mxu0
    %1854 = vdwg.mxu0
    %1855 = vmatpush.bf16.msra.mxu0 0
    %1856 = vmatpush.bf16.msra.mxu0 0
    %1857 = vmatpush.bf16.msra.mxu0 0
    %1858 = vmatpush.bf16.msra.mxu0 0
    %1859 = vmatpush.bf16.msra.mxu0 0
    %1860 = vmatpush.bf16.msra.mxu0 0
    %1861 = vmatpush.bf16.msra.mxu0 0
    %1862 = vmatpush.bf16.msra.mxu0 %v1837
    %1863 = vmatmul.bf16.gmra.mxu0 %v545
    %v1864 = vpop.f32.mrf.mxu0
    %v1865 = vadd.f32 0.0, %v1864
    %v1866 = vpop.f32.mrf.mxu0
    %1867 = vdwg.mxu0
    %1868 = vmatpush.bf16.msra.mxu0 0
    %1869 = vmatpush.bf16.msra.mxu0 0
    %1870 = vmatpush.bf16.msra.mxu0 0
    %1871 = vmatpush.bf16.msra.mxu0 0
    %1872 = vmatpush.bf16.msra.mxu0 0
    %1873 = vmatpush.bf16.msra.mxu0 0
    %1874 = vmatpush.bf16.msra.mxu0 0
    %1875 = vmatpush.bf16.msra.mxu0 %v1840
    %1876 = vmatmul.bf16.gmra.mxu0 %v545
    %v1877 = vpop.f32.mrf.mxu0
    %v1878 = vadd.f32 0.0, %v1877
    %v1879 = vpop.f32.mrf.mxu0
    %1880 = vdwg.mxu0
    %v1881 = vadd.f32 %v1810, %v1852
    %v1882 = vadd.f32 %v1811, %v1865
    %v1883 = vadd.f32 %v1812, %v1878
    %1884 = vst [vmem:[#allocation1] ss:$4 sm:$0xff] %v1355
    %v1885 = vld.sshfl [vmem:[#allocation1] sm:$0xff pattern:$0x73625140]
    %v1887 = vld.sshfl [vmem:[#allocation1 + $0x8] sm:$0xff pattern:$0x73625140]
    %v1889 = vld.sshfl [vmem:[#allocation1 + $0x10] sm:$0xff pattern:$0x73625140]
    %v1891 = vld.sshfl [vmem:[#allocation1 + $0x18] sm:$0xff pattern:$0x73625140]
    %1893 = vrot.lane.b32.xlu0 %v1885, 109
    %v1894 = vpop.permute.xlu0 %1893
    %1895 = vrot.lane.b32.xlu0 %v1887, 109
    %v1896 = vpop.permute.xlu0 %1895
    %1897 = vrot.lane.b32.xlu0 %v1889, 109
    %v1898 = vpop.permute.xlu0 %1897
    %1899 = vrot.lane.b32.xlu0 %v1891, 109
    %v1900 = vpop.permute.xlu0 %1899
    %v1901 = vsel %vm615, %v1894, %v1896
    %v1902 = vsel %vm615, %v1896, %v1898
    %v1903 = vsel %vm615, %v1898, %v1900
    %v1905 = vsel %vm52, %v1901, 0
    %v1908 = vsel %vm52, %v1902, 0
    %v1911 = vsel %vm52, %v1903, 0
    %1913 = vmatpush.bf16.msra.mxu0 0
    %1914 = vmatpush.bf16.msra.mxu0 0
    %1915 = vmatpush.bf16.msra.mxu0 0
    %1916 = vmatpush.bf16.msra.mxu0 0
    %1917 = vmatpush.bf16.msra.mxu0 0
    %1918 = vmatpush.bf16.msra.mxu0 0
    %1919 = vmatpush.bf16.msra.mxu0 0
    %1920 = vmatpush.bf16.msra.mxu0 %v1905
    %1921 = vmatmul.bf16.gmra.mxu0 %v620
    %v1922 = vpop.f32.mrf.mxu0
    %v1923 = vadd.f32 0.0, %v1922
    %v1924 = vpop.f32.mrf.mxu0
    %1925 = vdwg.mxu0
    %1926 = vmatpush.bf16.msra.mxu0 0
    %1927 = vmatpush.bf16.msra.mxu0 0
    %1928 = vmatpush.bf16.msra.mxu0 0
    %1929 = vmatpush.bf16.msra.mxu0 0
    %1930 = vmatpush.bf16.msra.mxu0 0
    %1931 = vmatpush.bf16.msra.mxu0 0
    %1932 = vmatpush.bf16.msra.mxu0 0
    %1933 = vmatpush.bf16.msra.mxu0 %v1908
    %1934 = vmatmul.bf16.gmra.mxu0 %v620
    %v1935 = vpop.f32.mrf.mxu0
    %v1936 = vadd.f32 0.0, %v1935
    %v1937 = vpop.f32.mrf.mxu0
    %1938 = vdwg.mxu0
    %1939 = vmatpush.bf16.msra.mxu0 0
    %1940 = vmatpush.bf16.msra.mxu0 0
    %1941 = vmatpush.bf16.msra.mxu0 0
    %1942 = vmatpush.bf16.msra.mxu0 0
    %1943 = vmatpush.bf16.msra.mxu0 0
    %1944 = vmatpush.bf16.msra.mxu0 0
    %1945 = vmatpush.bf16.msra.mxu0 0
    %1946 = vmatpush.bf16.msra.mxu0 %v1911
    %1947 = vmatmul.bf16.gmra.mxu0 %v620
    %v1948 = vpop.f32.mrf.mxu0
    %v1949 = vadd.f32 0.0, %v1948
    %v1950 = vpop.f32.mrf.mxu0
    %1951 = vdwg.mxu0
    %v1952 = vadd.f32 %v1881, %v1923
    %v1953 = vadd.f32 %v1882, %v1936
    %v1954 = vadd.f32 %v1883, %v1949
    %1955 = vst [vmem:[#allocation1] ss:$4 sm:$0xff] %v1357
    %v1956 = vld.sshfl [vmem:[#allocation1] sm:$0xff pattern:$0x73625140]
    %v1958 = vld.sshfl [vmem:[#allocation1 + $0x8] sm:$0xff pattern:$0x73625140]
    %v1960 = vld.sshfl [vmem:[#allocation1 + $0x10] sm:$0xff pattern:$0x73625140]
    %v1962 = vld.sshfl [vmem:[#allocation1 + $0x18] sm:$0xff pattern:$0x73625140]
    %1964 = vrot.lane.b32.xlu0 %v1956, 109
    %v1965 = vpop.permute.xlu0 %1964
    %1966 = vrot.lane.b32.xlu0 %v1958, 109
    %v1967 = vpop.permute.xlu0 %1966
    %1968 = vrot.lane.b32.xlu0 %v1960, 109
    %v1969 = vpop.permute.xlu0 %1968
    %1970 = vrot.lane.b32.xlu0 %v1962, 109
    %v1971 = vpop.permute.xlu0 %1970
    %v1972 = vsel %vm615, %v1965, %v1967
    %v1973 = vsel %vm615, %v1967, %v1969
    %v1974 = vsel %vm615, %v1969, %v1971
    %v1976 = vsel %vm52, %v1972, 0
    %v1979 = vsel %vm52, %v1973, 0
    %v1982 = vsel %vm52, %v1974, 0
    %1984 = vmatpush.bf16.msra.mxu0 0
    %1985 = vmatpush.bf16.msra.mxu0 0
    %1986 = vmatpush.bf16.msra.mxu0 0
    %1987 = vmatpush.bf16.msra.mxu0 0
    %1988 = vmatpush.bf16.msra.mxu0 0
    %1989 = vmatpush.bf16.msra.mxu0 0
    %1990 = vmatpush.bf16.msra.mxu0 0
    %1991 = vmatpush.bf16.msra.mxu0 %v1976
    %1992 = vmatmul.bf16.gmra.mxu0 %v694
    %v1993 = vpop.f32.mrf.mxu0
    %v1994 = vadd.f32 0.0, %v1993
    %v1995 = vpop.f32.mrf.mxu0
    %1996 = vdwg.mxu0
    %1997 = vmatpush.bf16.msra.mxu0 0
    %1998 = vmatpush.bf16.msra.mxu0 0
    %1999 = vmatpush.bf16.msra.mxu0 0
    %2000 = vmatpush.bf16.msra.mxu0 0
    %2001 = vmatpush.bf16.msra.mxu0 0
    %2002 = vmatpush.bf16.msra.mxu0 0
    %2003 = vmatpush.bf16.msra.mxu0 0
    %2004 = vmatpush.bf16.msra.mxu0 %v1979
    %2005 = vmatmul.bf16.gmra.mxu0 %v694
    %v2006 = vpop.f32.mrf.mxu0
    %v2007 = vadd.f32 0.0, %v2006
    %v2008 = vpop.f32.mrf.mxu0
    %2009 = vdwg.mxu0
    %2010 = vmatpush.bf16.msra.mxu0 0
    %2011 = vmatpush.bf16.msra.mxu0 0
    %2012 = vmatpush.bf16.msra.mxu0 0
    %2013 = vmatpush.bf16.msra.mxu0 0
    %2014 = vmatpush.bf16.msra.mxu0 0
    %2015 = vmatpush.bf16.msra.mxu0 0
    %2016 = vmatpush.bf16.msra.mxu0 0
    %2017 = vmatpush.bf16.msra.mxu0 %v1982
    %2018 = vmatmul.bf16.gmra.mxu0 %v694
    %v2019 = vpop.f32.mrf.mxu0
    %v2020 = vadd.f32 0.0, %v2019
    %v2021 = vpop.f32.mrf.mxu0
    %2022 = vdwg.mxu0
    %v2023 = vadd.f32 %v1952, %v1994
    %v2024 = vadd.f32 %v1953, %v2007
    %v2025 = vadd.f32 %v1954, %v2020
    %2026 = vst [vmem:[#allocation1] ss:$4 sm:$0xff] %v1355
    %v2027 = vld.sshfl [vmem:[#allocation1] sm:$0xff pattern:$0x73625140]
    %v2029 = vld.sshfl [vmem:[#allocation1 + $0x8] sm:$0xff pattern:$0x73625140]
    %v2031 = vld.sshfl [vmem:[#allocation1 + $0x10] sm:$0xff pattern:$0x73625140]
    %v2033 = vld.sshfl [vmem:[#allocation1 + $0x18] sm:$0xff pattern:$0x73625140]
    %2035 = vrot.lane.b32.xlu0 %v2027, 108
    %v2036 = vpop.permute.xlu0 %2035
    %2037 = vrot.lane.b32.xlu0 %v2029, 108
    %v2038 = vpop.permute.xlu0 %2037
    %2039 = vrot.lane.b32.xlu0 %v2031, 108
    %v2040 = vpop.permute.xlu0 %2039
    %2041 = vrot.lane.b32.xlu0 %v2033, 108
    %v2042 = vpop.permute.xlu0 %2041
    %v2043 = vsel %vm764, %v2036, %v2038
    %v2044 = vsel %vm764, %v2038, %v2040
    %v2045 = vsel %vm764, %v2040, %v2042
    %v2047 = vsel %vm52, %v2043, 0
    %v2050 = vsel %vm52, %v2044, 0
    %v2053 = vsel %vm52, %v2045, 0
    %2055 = vmatpush.bf16.msra.mxu0 0
    %2056 = vmatpush.bf16.msra.mxu0 0
    %2057 = vmatpush.bf16.msra.mxu0 0
    %2058 = vmatpush.bf16.msra.mxu0 0
    %2059 = vmatpush.bf16.msra.mxu0 0
    %2060 = vmatpush.bf16.msra.mxu0 0
    %2061 = vmatpush.bf16.msra.mxu0 0
    %2062 = vmatpush.bf16.msra.mxu0 %v2047
    %2063 = vmatmul.bf16.gmra.mxu0 %v769
    %v2064 = vpop.f32.mrf.mxu0
    %v2065 = vadd.f32 0.0, %v2064
    %v2066 = vpop.f32.mrf.mxu0
    %2067 = vdwg.mxu0
    %2068 = vmatpush.bf16.msra.mxu0 0
    %2069 = vmatpush.bf16.msra.mxu0 0
    %2070 = vmatpush.bf16.msra.mxu0 0
    %2071 = vmatpush.bf16.msra.mxu0 0
    %2072 = vmatpush.bf16.msra.mxu0 0
    %2073 = vmatpush.bf16.msra.mxu0 0
    %2074 = vmatpush.bf16.msra.mxu0 0
    %2075 = vmatpush.bf16.msra.mxu0 %v2050
    %2076 = vmatmul.bf16.gmra.mxu0 %v769
    %v2077 = vpop.f32.mrf.mxu0
    %v2078 = vadd.f32 0.0, %v2077
    %v2079 = vpop.f32.mrf.mxu0
    %2080 = vdwg.mxu0
    %2081 = vmatpush.bf16.msra.mxu0 0
    %2082 = vmatpush.bf16.msra.mxu0 0
    %2083 = vmatpush.bf16.msra.mxu0 0
    %2084 = vmatpush.bf16.msra.mxu0 0
    %2085 = vmatpush.bf16.msra.mxu0 0
    %2086 = vmatpush.bf16.msra.mxu0 0
    %2087 = vmatpush.bf16.msra.mxu0 0
    %2088 = vmatpush.bf16.msra.mxu0 %v2053
    %2089 = vmatmul.bf16.gmra.mxu0 %v769
    %v2090 = vpop.f32.mrf.mxu0
    %v2091 = vadd.f32 0.0, %v2090
    %v2092 = vpop.f32.mrf.mxu0
    %2093 = vdwg.mxu0
    %v2094 = vadd.f32 %v2023, %v2065
    %v2095 = vadd.f32 %v2024, %v2078
    %v2096 = vadd.f32 %v2025, %v2091
    %2097 = vst [vmem:[#allocation1] ss:$4 sm:$0xff] %v1357
    %v2098 = vld.sshfl [vmem:[#allocation1] sm:$0xff pattern:$0x73625140]
    %v2100 = vld.sshfl [vmem:[#allocation1 + $0x8] sm:$0xff pattern:$0x73625140]
    %v2102 = vld.sshfl [vmem:[#allocation1 + $0x10] sm:$0xff pattern:$0x73625140]
    %v2104 = vld.sshfl [vmem:[#allocation1 + $0x18] sm:$0xff pattern:$0x73625140]
    %2106 = vrot.lane.b32.xlu0 %v2098, 108
    %v2107 = vpop.permute.xlu0 %2106
    %2108 = vrot.lane.b32.xlu0 %v2100, 108
    %v2109 = vpop.permute.xlu0 %2108
    %2110 = vrot.lane.b32.xlu0 %v2102, 108
    %v2111 = vpop.permute.xlu0 %2110
    %2112 = vrot.lane.b32.xlu0 %v2104, 108
    %v2113 = vpop.permute.xlu0 %2112
    %v2114 = vsel %vm764, %v2107, %v2109
    %v2115 = vsel %vm764, %v2109, %v2111
    %v2116 = vsel %vm764, %v2111, %v2113
    %v2118 = vsel %vm52, %v2114, 0
    %v2121 = vsel %vm52, %v2115, 0
    %v2124 = vsel %vm52, %v2116, 0
    %2126 = vmatpush.bf16.msra.mxu0 0
    %2127 = vmatpush.bf16.msra.mxu0 0
    %2128 = vmatpush.bf16.msra.mxu0 0
    %2129 = vmatpush.bf16.msra.mxu0 0
    %2130 = vmatpush.bf16.msra.mxu0 0
    %2131 = vmatpush.bf16.msra.mxu0 0
    %2132 = vmatpush.bf16.msra.mxu0 0
    %2133 = vmatpush.bf16.msra.mxu0 %v2118
    %2134 = vmatmul.bf16.gmra.mxu0 %v843
    %v2135 = vpop.f32.mrf.mxu0
    %v2136 = vadd.f32 0.0, %v2135
    %v2137 = vpop.f32.mrf.mxu0
    %2138 = vdwg.mxu0
    %2139 = vmatpush.bf16.msra.mxu0 0
    %2140 = vmatpush.bf16.msra.mxu0 0
    %2141 = vmatpush.bf16.msra.mxu0 0
    %2142 = vmatpush.bf16.msra.mxu0 0
    %2143 = vmatpush.bf16.msra.mxu0 0
    %2144 = vmatpush.bf16.msra.mxu0 0
    %2145 = vmatpush.bf16.msra.mxu0 0
    %2146 = vmatpush.bf16.msra.mxu0 %v2121
    %2147 = vmatmul.bf16.gmra.mxu0 %v843
    %v2148 = vpop.f32.mrf.mxu0
    %v2149 = vadd.f32 0.0, %v2148
    %v2150 = vpop.f32.mrf.mxu0
    %2151 = vdwg.mxu0
    %2152 = vmatpush.bf16.msra.mxu0 0
    %2153 = vmatpush.bf16.msra.mxu0 0
    %2154 = vmatpush.bf16.msra.mxu0 0
    %2155 = vmatpush.bf16.msra.mxu0 0
    %2156 = vmatpush.bf16.msra.mxu0 0
    %2157 = vmatpush.bf16.msra.mxu0 0
    %2158 = vmatpush.bf16.msra.mxu0 0
    %2159 = vmatpush.bf16.msra.mxu0 %v2124
    %2160 = vmatmul.bf16.gmra.mxu0 %v843
    %v2161 = vpop.f32.mrf.mxu0
    %v2162 = vadd.f32 0.0, %v2161
    %v2163 = vpop.f32.mrf.mxu0
    %2164 = vdwg.mxu0
    %v2165 = vadd.f32 %v2094, %v2136
    %v2166 = vadd.f32 %v2095, %v2149
    %v2167 = vadd.f32 %v2096, %v2162
    %2168 = vst [vmem:[#allocation1] ss:$4 sm:$0xff] %v1355
    %v2169 = vld.sshfl [vmem:[#allocation1] sm:$0xff pattern:$0x73625140]
    %v2171 = vld.sshfl [vmem:[#allocation1 + $0x8] sm:$0xff pattern:$0x73625140]
    %v2173 = vld.sshfl [vmem:[#allocation1 + $0x10] sm:$0xff pattern:$0x73625140]
    %v2175 = vld.sshfl [vmem:[#allocation1 + $0x18] sm:$0xff pattern:$0x73625140]
    %2177 = vrot.lane.b32.xlu0 %v2169, 92
    %v2178 = vpop.permute.xlu0 %2177
    %2179 = vrot.lane.b32.xlu0 %v2171, 92
    %v2180 = vpop.permute.xlu0 %2179
    %2181 = vrot.lane.b32.xlu0 %v2173, 92
    %v2182 = vpop.permute.xlu0 %2181
    %2183 = vrot.lane.b32.xlu0 %v2175, 92
    %v2184 = vpop.permute.xlu0 %2183
    %v2185 = vsel %vm913, %v2178, %v2180
    %v2186 = vsel %vm913, %v2180, %v2182
    %v2187 = vsel %vm913, %v2182, %v2184
    %v2189 = vsel %vm52, %v2185, 0
    %v2192 = vsel %vm52, %v2186, 0
    %v2195 = vsel %vm52, %v2187, 0
    %2197 = vmatpush.bf16.msra.mxu0 0
    %2198 = vmatpush.bf16.msra.mxu0 0
    %2199 = vmatpush.bf16.msra.mxu0 0
    %2200 = vmatpush.bf16.msra.mxu0 0
    %2201 = vmatpush.bf16.msra.mxu0 0
    %2202 = vmatpush.bf16.msra.mxu0 0
    %2203 = vmatpush.bf16.msra.mxu0 0
    %2204 = vmatpush.bf16.msra.mxu0 %v2189
    %2205 = vmatmul.bf16.gmra.mxu0 %v918
    %v2206 = vpop.f32.mrf.mxu0
    %v2207 = vadd.f32 0.0, %v2206
    %v2208 = vpop.f32.mrf.mxu0
    %2209 = vdwg.mxu0
    %2210 = vmatpush.bf16.msra.mxu0 0
    %2211 = vmatpush.bf16.msra.mxu0 0
    %2212 = vmatpush.bf16.msra.mxu0 0
    %2213 = vmatpush.bf16.msra.mxu0 0
    %2214 = vmatpush.bf16.msra.mxu0 0
    %2215 = vmatpush.bf16.msra.mxu0 0
    %2216 = vmatpush.bf16.msra.mxu0 0
    %2217 = vmatpush.bf16.msra.mxu0 %v2192
    %2218 = vmatmul.bf16.gmra.mxu0 %v918
    %v2219 = vpop.f32.mrf.mxu0
    %v2220 = vadd.f32 0.0, %v2219
    %v2221 = vpop.f32.mrf.mxu0
    %2222 = vdwg.mxu0
    %2223 = vmatpush.bf16.msra.mxu0 0
    %2224 = vmatpush.bf16.msra.mxu0 0
    %2225 = vmatpush.bf16.msra.mxu0 0
    %2226 = vmatpush.bf16.msra.mxu0 0
    %2227 = vmatpush.bf16.msra.mxu0 0
    %2228 = vmatpush.bf16.msra.mxu0 0
    %2229 = vmatpush.bf16.msra.mxu0 0
    %2230 = vmatpush.bf16.msra.mxu0 %v2195
    %2231 = vmatmul.bf16.gmra.mxu0 %v918
    %v2232 = vpop.f32.mrf.mxu0
    %v2233 = vadd.f32 0.0, %v2232
    %v2234 = vpop.f32.mrf.mxu0
    %2235 = vdwg.mxu0
    %v2236 = vadd.f32 %v2165, %v2207
    %v2237 = vadd.f32 %v2166, %v2220
    %v2238 = vadd.f32 %v2167, %v2233
    %2239 = vst [vmem:[#allocation1] ss:$4 sm:$0xff] %v1357
    %v2240 = vld.sshfl [vmem:[#allocation1] sm:$0xff pattern:$0x73625140]
    %v2242 = vld.sshfl [vmem:[#allocation1 + $0x8] sm:$0xff pattern:$0x73625140]
    %v2244 = vld.sshfl [vmem:[#allocation1 + $0x10] sm:$0xff pattern:$0x73625140]
    %v2246 = vld.sshfl [vmem:[#allocation1 + $0x18] sm:$0xff pattern:$0x73625140]
    %2248 = vrot.lane.b32.xlu0 %v2240, 92
    %v2249 = vpop.permute.xlu0 %2248
    %2250 = vrot.lane.b32.xlu0 %v2242, 92
    %v2251 = vpop.permute.xlu0 %2250
    %2252 = vrot.lane.b32.xlu0 %v2244, 92
    %v2253 = vpop.permute.xlu0 %2252
    %2254 = vrot.lane.b32.xlu0 %v2246, 92
    %v2255 = vpop.permute.xlu0 %2254
    %v2256 = vsel %vm913, %v2249, %v2251
    %v2257 = vsel %vm913, %v2251, %v2253
    %v2258 = vsel %vm913, %v2253, %v2255
    %v2260 = vsel %vm52, %v2256, 0
    %v2263 = vsel %vm52, %v2257, 0
    %v2266 = vsel %vm52, %v2258, 0
    %2268 = vmatpush.bf16.msra.mxu0 0
    %2269 = vmatpush.bf16.msra.mxu0 0
    %2270 = vmatpush.bf16.msra.mxu0 0
    %2271 = vmatpush.bf16.msra.mxu0 0
    %2272 = vmatpush.bf16.msra.mxu0 0
    %2273 = vmatpush.bf16.msra.mxu0 0
    %2274 = vmatpush.bf16.msra.mxu0 0
    %2275 = vmatpush.bf16.msra.mxu0 %v2260
    %2276 = vmatmul.bf16.gmra.mxu0 %v992
    %v2277 = vpop.f32.mrf.mxu0
    %v2278 = vadd.f32 0.0, %v2277
    %v2279 = vpop.f32.mrf.mxu0
    %2280 = vdwg.mxu0
    %2281 = vmatpush.bf16.msra.mxu0 0
    %2282 = vmatpush.bf16.msra.mxu0 0
    %2283 = vmatpush.bf16.msra.mxu0 0
    %2284 = vmatpush.bf16.msra.mxu0 0
    %2285 = vmatpush.bf16.msra.mxu0 0
    %2286 = vmatpush.bf16.msra.mxu0 0
    %2287 = vmatpush.bf16.msra.mxu0 0
    %2288 = vmatpush.bf16.msra.mxu0 %v2263
    %2289 = vmatmul.bf16.gmra.mxu0 %v992
    %v2290 = vpop.f32.mrf.mxu0
    %v2291 = vadd.f32 0.0, %v2290
    %v2292 = vpop.f32.mrf.mxu0
    %2293 = vdwg.mxu0
    %2294 = vmatpush.bf16.msra.mxu0 0
    %2295 = vmatpush.bf16.msra.mxu0 0
    %2296 = vmatpush.bf16.msra.mxu0 0
    %2297 = vmatpush.bf16.msra.mxu0 0
    %2298 = vmatpush.bf16.msra.mxu0 0
    %2299 = vmatpush.bf16.msra.mxu0 0
    %2300 = vmatpush.bf16.msra.mxu0 0
    %2301 = vmatpush.bf16.msra.mxu0 %v2266
    %2302 = vmatmul.bf16.gmra.mxu0 %v992
    %v2303 = vpop.f32.mrf.mxu0
    %v2304 = vadd.f32 0.0, %v2303
    %v2305 = vpop.f32.mrf.mxu0
    %2306 = vdwg.mxu0
    %v2307 = vadd.f32 %v2236, %v2278
    %v2308 = vadd.f32 %v2237, %v2291
    %v2309 = vadd.f32 %v2238, %v2304
    %2310 = vst [vmem:[#allocation1] ss:$4 sm:$0xff] %v1355
    %v2311 = vld.sshfl [vmem:[#allocation1] sm:$0xff pattern:$0x73625140]
    %v2313 = vld.sshfl [vmem:[#allocation1 + $0x8] sm:$0xff pattern:$0x73625140]
    %v2315 = vld.sshfl [vmem:[#allocation1 + $0x10] sm:$0xff pattern:$0x73625140]
    %v2317 = vld.sshfl [vmem:[#allocation1 + $0x18] sm:$0xff pattern:$0x73625140]
    %2319 = vrot.lane.b32.xlu0 %v2311, 91
    %v2320 = vpop.permute.xlu0 %2319
    %2321 = vrot.lane.b32.xlu0 %v2313, 91
    %v2322 = vpop.permute.xlu0 %2321
    %2323 = vrot.lane.b32.xlu0 %v2315, 91
    %v2324 = vpop.permute.xlu0 %2323
    %2325 = vrot.lane.b32.xlu0 %v2317, 91
    %v2326 = vpop.permute.xlu0 %2325
    %v2327 = vsel %vm1062, %v2320, %v2322
    %v2328 = vsel %vm1062, %v2322, %v2324
    %v2329 = vsel %vm1062, %v2324, %v2326
    %v2331 = vsel %vm52, %v2327, 0
    %v2334 = vsel %vm52, %v2328, 0
    %v2337 = vsel %vm52, %v2329, 0
    %2339 = vmatpush.bf16.msra.mxu0 0
    %2340 = vmatpush.bf16.msra.mxu0 0
    %2341 = vmatpush.bf16.msra.mxu0 0
    %2342 = vmatpush.bf16.msra.mxu0 0
    %2343 = vmatpush.bf16.msra.mxu0 0
    %2344 = vmatpush.bf16.msra.mxu0 0
    %2345 = vmatpush.bf16.msra.mxu0 0
    %2346 = vmatpush.bf16.msra.mxu0 %v2331
    %2347 = vmatmul.bf16.gmra.mxu0 %v1067
    %v2348 = vpop.f32.mrf.mxu0
    %v2349 = vadd.f32 0.0, %v2348
    %v2350 = vpop.f32.mrf.mxu0
    %2351 = vdwg.mxu0
    %2352 = vmatpush.bf16.msra.mxu0 0
    %2353 = vmatpush.bf16.msra.mxu0 0
    %2354 = vmatpush.bf16.msra.mxu0 0
    %2355 = vmatpush.bf16.msra.mxu0 0
    %2356 = vmatpush.bf16.msra.mxu0 0
    %2357 = vmatpush.bf16.msra.mxu0 0
    %2358 = vmatpush.bf16.msra.mxu0 0
    %2359 = vmatpush.bf16.msra.mxu0 %v2334
    %2360 = vmatmul.bf16.gmra.mxu0 %v1067
    %v2361 = vpop.f32.mrf.mxu0
    %v2362 = vadd.f32 0.0, %v2361
    %v2363 = vpop.f32.mrf.mxu0
    %2364 = vdwg.mxu0
    %2365 = vmatpush.bf16.msra.mxu0 0
    %2366 = vmatpush.bf16.msra.mxu0 0
    %2367 = vmatpush.bf16.msra.mxu0 0
    %2368 = vmatpush.bf16.msra.mxu0 0
    %2369 = vmatpush.bf16.msra.mxu0 0
    %2370 = vmatpush.bf16.msra.mxu0 0
    %2371 = vmatpush.bf16.msra.mxu0 0
    %2372 = vmatpush.bf16.msra.mxu0 %v2337
    %2373 = vmatmul.bf16.gmra.mxu0 %v1067
    %v2374 = vpop.f32.mrf.mxu0
    %v2375 = vadd.f32 0.0, %v2374
    %v2376 = vpop.f32.mrf.mxu0
    %2377 = vdwg.mxu0
    %v2378 = vadd.f32 %v2307, %v2349
    %v2379 = vadd.f32 %v2308, %v2362
    %v2380 = vadd.f32 %v2309, %v2375
    %2381 = vst [vmem:[#allocation1] ss:$4 sm:$0xff] %v1357
    %v2382 = vld.sshfl [vmem:[#allocation1] sm:$0xff pattern:$0x73625140]
    %v2384 = vld.sshfl [vmem:[#allocation1 + $0x8] sm:$0xff pattern:$0x73625140]
    %v2386 = vld.sshfl [vmem:[#allocation1 + $0x10] sm:$0xff pattern:$0x73625140]
    %v2388 = vld.sshfl [vmem:[#allocation1 + $0x18] sm:$0xff pattern:$0x73625140]
    %2390 = vrot.lane.b32.xlu0 %v2382, 91
    %v2391 = vpop.permute.xlu0 %2390
    %2392 = vrot.lane.b32.xlu0 %v2384, 91
    %v2393 = vpop.permute.xlu0 %2392
    %2394 = vrot.lane.b32.xlu0 %v2386, 91
    %v2395 = vpop.permute.xlu0 %2394
    %2396 = vrot.lane.b32.xlu0 %v2388, 91
    %v2397 = vpop.permute.xlu0 %2396
    %v2398 = vsel %vm1062, %v2391, %v2393
    %v2399 = vsel %vm1062, %v2393, %v2395
    %v2400 = vsel %vm1062, %v2395, %v2397
    %v2402 = vsel %vm52, %v2398, 0
    %v2405 = vsel %vm52, %v2399, 0
    %v2408 = vsel %vm52, %v2400, 0
    %2410 = vmatpush.bf16.msra.mxu0 0
    %2411 = vmatpush.bf16.msra.mxu0 0
    %2412 = vmatpush.bf16.msra.mxu0 0
    %2413 = vmatpush.bf16.msra.mxu0 0
    %2414 = vmatpush.bf16.msra.mxu0 0
    %2415 = vmatpush.bf16.msra.mxu0 0
    %2416 = vmatpush.bf16.msra.mxu0 0
    %2417 = vmatpush.bf16.msra.mxu0 %v2402
    %2418 = vmatmul.bf16.gmra.mxu0 %v1141
    %v2419 = vpop.f32.mrf.mxu0
    %v2420 = vadd.f32 0.0, %v2419
    %v2421 = vpop.f32.mrf.mxu0
    %2422 = vdwg.mxu0
    %2423 = vmatpush.bf16.msra.mxu0 0
    %2424 = vmatpush.bf16.msra.mxu0 0
    %2425 = vmatpush.bf16.msra.mxu0 0
    %2426 = vmatpush.bf16.msra.mxu0 0
    %2427 = vmatpush.bf16.msra.mxu0 0
    %2428 = vmatpush.bf16.msra.mxu0 0
    %2429 = vmatpush.bf16.msra.mxu0 0
    %2430 = vmatpush.bf16.msra.mxu0 %v2405
    %2431 = vmatmul.bf16.gmra.mxu0 %v1141
    %v2432 = vpop.f32.mrf.mxu0
    %v2433 = vadd.f32 0.0, %v2432
    %v2434 = vpop.f32.mrf.mxu0
    %2435 = vdwg.mxu0
    %2436 = vmatpush.bf16.msra.mxu0 0
    %2437 = vmatpush.bf16.msra.mxu0 0
    %2438 = vmatpush.bf16.msra.mxu0 0
    %2439 = vmatpush.bf16.msra.mxu0 0
    %2440 = vmatpush.bf16.msra.mxu0 0
    %2441 = vmatpush.bf16.msra.mxu0 0
    %2442 = vmatpush.bf16.msra.mxu0 0
    %2443 = vmatpush.bf16.msra.mxu0 %v2408
    %2444 = vmatmul.bf16.gmra.mxu0 %v1141
    %v2445 = vpop.f32.mrf.mxu0
    %v2446 = vadd.f32 0.0, %v2445
    %v2447 = vpop.f32.mrf.mxu0
    %2448 = vdwg.mxu0
    %v2449 = vadd.f32 %v2378, %v2420
    %v2450 = vadd.f32 %v2379, %v2433
    %v2451 = vadd.f32 %v2380, %v2446
    %2452 = vst [vmem:[#allocation1] ss:$4 sm:$0xff] %v1355
    %v2453 = vld.sshfl [vmem:[#allocation1] sm:$0xff pattern:$0x73625140]
    %v2455 = vld.sshfl [vmem:[#allocation1 + $0x8] sm:$0xff pattern:$0x73625140]
    %v2457 = vld.sshfl [vmem:[#allocation1 + $0x10] sm:$0xff pattern:$0x73625140]
    %v2459 = vld.sshfl [vmem:[#allocation1 + $0x18] sm:$0xff pattern:$0x73625140]
    %2461 = vrot.lane.b32.xlu0 %v2453, 90
    %v2462 = vpop.permute.xlu0 %2461
    %2463 = vrot.lane.b32.xlu0 %v2455, 90
    %v2464 = vpop.permute.xlu0 %2463
    %2465 = vrot.lane.b32.xlu0 %v2457, 90
    %v2466 = vpop.permute.xlu0 %2465
    %2467 = vrot.lane.b32.xlu0 %v2459, 90
    %v2468 = vpop.permute.xlu0 %2467
    %v2469 = vsel %vm1211, %v2462, %v2464
    %v2470 = vsel %vm1211, %v2464, %v2466
    %v2471 = vsel %vm1211, %v2466, %v2468
    %v2473 = vsel %vm52, %v2469, 0
    %v2476 = vsel %vm52, %v2470, 0
    %v2479 = vsel %vm52, %v2471, 0
    %2481 = vmatpush.bf16.msra.mxu0 0
    %2482 = vmatpush.bf16.msra.mxu0 0
    %2483 = vmatpush.bf16.msra.mxu0 0
    %2484 = vmatpush.bf16.msra.mxu0 0
    %2485 = vmatpush.bf16.msra.mxu0 0
    %2486 = vmatpush.bf16.msra.mxu0 0
    %2487 = vmatpush.bf16.msra.mxu0 0
    %2488 = vmatpush.bf16.msra.mxu0 %v2473
    %2489 = vmatmul.bf16.gmra.mxu0 %v1216
    %v2490 = vpop.f32.mrf.mxu0
    %v2491 = vadd.f32 0.0, %v2490
    %v2492 = vpop.f32.mrf.mxu0
    %2493 = vdwg.mxu0
    %2494 = vmatpush.bf16.msra.mxu0 0
    %2495 = vmatpush.bf16.msra.mxu0 0
    %2496 = vmatpush.bf16.msra.mxu0 0
    %2497 = vmatpush.bf16.msra.mxu0 0
    %2498 = vmatpush.bf16.msra.mxu0 0
    %2499 = vmatpush.bf16.msra.mxu0 0
    %2500 = vmatpush.bf16.msra.mxu0 0
    %2501 = vmatpush.bf16.msra.mxu0 %v2476
    %2502 = vmatmul.bf16.gmra.mxu0 %v1216
    %v2503 = vpop.f32.mrf.mxu0
    %v2504 = vadd.f32 0.0, %v2503
    %v2505 = vpop.f32.mrf.mxu0
    %2506 = vdwg.mxu0
    %2507 = vmatpush.bf16.msra.mxu0 0
    %2508 = vmatpush.bf16.msra.mxu0 0
    %2509 = vmatpush.bf16.msra.mxu0 0
    %2510 = vmatpush.bf16.msra.mxu0 0
    %2511 = vmatpush.bf16.msra.mxu0 0
    %2512 = vmatpush.bf16.msra.mxu0 0
    %2513 = vmatpush.bf16.msra.mxu0 0
    %2514 = vmatpush.bf16.msra.mxu0 %v2479
    %2515 = vmatmul.bf16.gmra.mxu0 %v1216
    %v2516 = vpop.f32.mrf.mxu0
    %v2517 = vadd.f32 0.0, %v2516
    %v2518 = vpop.f32.mrf.mxu0
    %2519 = vdwg.mxu0
    %v2520 = vadd.f32 %v2449, %v2491
    %v2521 = vadd.f32 %v2450, %v2504
    %v2522 = vadd.f32 %v2451, %v2517
    %2523 = vst [vmem:[#allocation1] ss:$4 sm:$0xff] %v1357
    %v2524 = vld.sshfl [vmem:[#allocation1] sm:$0xff pattern:$0x73625140]
    %v2526 = vld.sshfl [vmem:[#allocation1 + $0x8] sm:$0xff pattern:$0x73625140]
    %v2528 = vld.sshfl [vmem:[#allocation1 + $0x10] sm:$0xff pattern:$0x73625140]
    %v2530 = vld.sshfl [vmem:[#allocation1 + $0x18] sm:$0xff pattern:$0x73625140]
    %2532 = vrot.lane.b32.xlu0 %v2524, 90
    %v2533 = vpop.permute.xlu0 %2532
    %2534 = vrot.lane.b32.xlu0 %v2526, 90
    %v2535 = vpop.permute.xlu0 %2534
    %2536 = vrot.lane.b32.xlu0 %v2528, 90
    %v2537 = vpop.permute.xlu0 %2536
    %2538 = vrot.lane.b32.xlu0 %v2530, 90
    %v2539 = vpop.permute.xlu0 %2538
    %v2540 = vsel %vm1211, %v2533, %v2535
    %v2541 = vsel %vm1211, %v2535, %v2537
    %v2542 = vsel %vm1211, %v2537, %v2539
    %v2544 = vsel %vm52, %v2540, 0
    %v2547 = vsel %vm52, %v2541, 0
    %v2550 = vsel %vm52, %v2542, 0
    %2552 = vmatpush.bf16.msra.mxu0 0
    %2553 = vmatpush.bf16.msra.mxu0 0
    %2554 = vmatpush.bf16.msra.mxu0 0
    %2555 = vmatpush.bf16.msra.mxu0 0
    %2556 = vmatpush.bf16.msra.mxu0 0
    %2557 = vmatpush.bf16.msra.mxu0 0
    %2558 = vmatpush.bf16.msra.mxu0 0
    %2559 = vmatpush.bf16.msra.mxu0 %v2544
    %2560 = vmatmul.bf16.gmra.mxu0 %v1290
    %v2561 = vpop.f32.mrf.mxu0
    %v2562 = vadd.f32 0.0, %v2561
    %v2563 = vpop.f32.mrf.mxu0
    %2564 = vdwg.mxu0
    %2565 = vmatpush.bf16.msra.mxu0 0
    %2566 = vmatpush.bf16.msra.mxu0 0
    %2567 = vmatpush.bf16.msra.mxu0 0
    %2568 = vmatpush.bf16.msra.mxu0 0
    %2569 = vmatpush.bf16.msra.mxu0 0
    %2570 = vmatpush.bf16.msra.mxu0 0
    %2571 = vmatpush.bf16.msra.mxu0 0
    %2572 = vmatpush.bf16.msra.mxu0 %v2547
    %2573 = vmatmul.bf16.gmra.mxu0 %v1290
    %v2574 = vpop.f32.mrf.mxu0
    %v2575 = vadd.f32 0.0, %v2574
    %v2576 = vpop.f32.mrf.mxu0
    %2577 = vdwg.mxu0
    %2578 = vmatpush.bf16.msra.mxu0 0
    %2579 = vmatpush.bf16.msra.mxu0 0
    %2580 = vmatpush.bf16.msra.mxu0 0
    %2581 = vmatpush.bf16.msra.mxu0 0
    %2582 = vmatpush.bf16.msra.mxu0 0
    %2583 = vmatpush.bf16.msra.mxu0 0
    %2584 = vmatpush.bf16.msra.mxu0 0
    %2585 = vmatpush.bf16.msra.mxu0 %v2550
    %2586 = vmatmul.bf16.gmra.mxu0 %v1290
    %v2587 = vpop.f32.mrf.mxu0
    %v2588 = vadd.f32 0.0, %v2587
    %v2589 = vpop.f32.mrf.mxu0
    %2590 = vdwg.mxu0
    %v2591 = vadd.f32 %v2520, %v2562
    %v2592 = vadd.f32 %v2521, %v2575
    %v2593 = vadd.f32 %v2522, %v2588
    %v2594 = vadd.f32 %v2591, %v1346
    %v2595 = vadd.f32 %v2592, %v1346
    %v2596 = vadd.f32 %v2593, %v1346
    %s2597 = scalar_lea.vmem [#allocation2], 24
    %2598 = vst [vmem:[%s2597] sm:$0xff] %v2594
    %2599 = vst [vmem:[%s2597 + $0x8] sm:$0xff] %v2595
    %2600 = vst [vmem:[%s2597 + $0x10] sm:$0xff] %v2596
    // Predicated region
    $region22: #{tpu_custom_call.1} parent=1 // pred_check
      _
    $region23: #{tpu_custom_call.1} parent=1 // pred_check_branch
      %2602 = sbr.rel (0) target = $region25
    $region24: #{tpu_custom_call.1} parent=1 // pred_region
      %2604 = vsyncadd [#allocation3], 0
      %s2605 = sshll.u32 [#allocation2], 4
      %s2606 = int_to_ptr.vmem [resolvable:$true] %s2605
      %s2607 = sshll.u32 %s5, 4
      %s2608 = int_to_ptr.hbm [resolvable:$true] %s2607
      %2613 = dma.vmem_to_hbm [thread:$0]  %s2606, 768, %s2608, [#allocation3], 384, 384, 24
    $region25: #{tpu_custom_call.1} parent=1 // pred_fallthru
      _
    // Predicated region
    $region26: #{tpu_custom_call.1} parent=1 // pred_check
      _
    $region27: #{tpu_custom_call.1} parent=1 // pred_check_branch
      %2615 = sbr.rel (0) target = $region29
    $region28: #{tpu_custom_call.1} parent=1 // pred_region
      %2617 = dma.done [#allocation3], 768
    $region29: #{tpu_custom_call.1} parent=1 // pred_fallthru
      _
    %2618 = vsyncpa [#allocation3], 1

</llo_original>
